<compile_context>
chip_gen: v5e
topology: v5e:2x2
jax: 0.10.0
libtpu: 0.0.40
codegen_flags: <defaults>
</compile_context>

<pallas_src>
import functools

import numpy as np
import jax
import jax.numpy as jnp
from jax import lax
from jax.experimental import pallas as pl
from jax.experimental.pallas import tpu as pltpu


# ----------------------------------------------------------------------------- config
B, C, T = 2, 16, 128            # batch, EEG channels, time steps
NUM_KERNELS = 8                 # ROCKET kernels per RBP module
KERNEL_LEN = 9                  # ROCKET kernel length
DILATIONS = (1, 2, 4)
NUM_REGIONS_PER_SPLIT = (4, 8)  # montage splits of every RBP module
NUM_RBP_MODULES = 2             # one RBPDesign with num_designs=2


# ----------------------------------------------------------------------------- kernel
def fused_rbp_kernel(x_ref, toep_ref, bias_ref, w_ref, mask_ref, o_ref,
                     *, num_kernels_total, time_steps):
    """Fused ROCKET features + attention pooling of all modules / montage splits.

    Grid: (batch,). Per grid step:
      x_ref:    (1, C, T)        f32  raw EEG of one batch element        (VMEM)
      toep_ref: (T, Ktot*T)      bf16 Toeplitz matrices, all ROCKET kernels (VMEM)
      bias_ref: (Ktot,)          f32  ROCKET conv bias per kernel          (SMEM)
      w_ref:    (R_all, 2*Ktot)  f32  attention FC weights, block-diagonal (VMEM)
      mask_ref: (R_all, C)       f32  channel->region masks, all splits    (VMEM)
      o_ref:    (1, R_all, T)    f32  region representations, all splits   (VMEM)
    """
    x = x_ref[0]                                                       # (C, T) f32

    # ---- ROCKET: one MXU push against every Toeplitz matrix of every module.
    y = jnp.dot(x.astype(jnp.bfloat16), toep_ref[...],
                preferred_element_type=jnp.float32)                    # (C, Ktot*T)

    # ---- PPV / max per kernel; conv bias folded into the reductions
    #      (ppv = mean(conv > -b), max = max(conv) + b) -> no K*T-wide bias add.
    ppvs, maxs = [], []
    for k in range(num_kernels_total):              # static, 128-aligned lane slices
        b_k = bias_ref[k]                                              # SMEM scalar
        yk = y[:, k * time_steps:(k + 1) * time_steps]                 # (C, T)
        ppvs.append(jnp.mean((yk > -b_k).astype(jnp.float32), axis=-1, keepdims=True))
        maxs.append(jnp.max(yk, axis=-1, keepdims=True) + b_k)
    feat = jnp.concatenate(ppvs + maxs, axis=-1)                       # (C, 2*Ktot), VMEM only

    # ---- attention pooling for all modules / montage splits at once (per-region
    #      FC bias is constant per softmax row -> exactly cancels, omitted).
    logits = lax.dot_general(w_ref[...], feat, (((1,), (1,)), ((), ())),
                             preferred_element_type=jnp.float32)       # (R_all, C)
    mask = mask_ref[...]
    logits = jnp.where(mask > 0, logits, -1e30)
    m = jnp.max(logits, axis=-1, keepdims=True)
    e = jnp.exp(logits - m) * mask
    denom = jnp.maximum(jnp.sum(e, axis=-1, keepdims=True), 1e-20)     # empty-region guard
    attn = e * pl.reciprocal(denom, approx=True)
    o_ref[0] = jnp.dot(attn, x, preferred_element_type=jnp.float32)    # (R_all, T)


# ----------------------------------------------------------------------------- wrapper
@functools.partial(jax.jit, static_argnames=("num_kernels_total", "split_slices"))
def region_based_pooling_forward(x, toeplitz2d, bias_all, w_all, mask_all, *,
                                 num_kernels_total, split_slices):
    """RegionBasedPooling.forward: tuple(chain(*[module outputs])), one pallas_call."""
    b, c, t = x.shape
    k = num_kernels_total
    r_all = w_all.shape[0]

    flops = 2 * b * c * t * (k * t) + 2 * b * r_all * c * (2 * k + t)
    transcendentals = b * r_all * (c + 1)
    bytes_accessed = (x.size * 4 + toeplitz2d.size * 2 + bias_all.size * 4
                      + w_all.size * 4 + mask_all.size * 4 + b * r_all * t * 4)

    out = pl.pallas_call(
        functools.partial(fused_rbp_kernel, num_kernels_total=k, time_steps=t),
        out_shape=jax.ShapeDtypeStruct((b, r_all, t), jnp.float32),
        grid=(b,),
        in_specs=[
            pl.BlockSpec((1, c, t), lambda bi: (bi, 0, 0)),
            pl.BlockSpec((t, k * t), lambda bi: (0, 0)),
            pl.BlockSpec(memory_space=pltpu.MemorySpace.SMEM),         # (Ktot,) conv bias
            pl.BlockSpec((r_all, 2 * k), lambda bi: (0, 0)),
            pl.BlockSpec((r_all, c), lambda bi: (0, 0)),
        ],
        out_specs=pl.BlockSpec((1, r_all, t), lambda bi: (bi, 0, 0)),
        compiler_params=pltpu.CompilerParams(dimension_semantics=("parallel",)),
        cost_estimate=pl.CostEstimate(flops=int(flops),
                                      transcendentals=int(transcendentals),
                                      bytes_accessed=int(bytes_accessed)),
    )(x, toeplitz2d, bias_all, w_all, mask_all)

    # split the stacked (B, R_all, T) slab back into per-montage-split tensors,
    # reproducing tuple(chain(*[module outputs])) container semantics.
    return tuple(out[:, start:start + r, :] for start, r in split_slices)


# ----------------------------------------------------------------------------- param init (deterministic, synthetic)
def make_toeplitz3d(weights, dilations, t, ker_len):
    """Express 'same'-padded dilated cross-correlation as (T, T) matrices (no bias row)."""
    k = weights.shape[0]
    mat = np.zeros((k, t, t), np.float32)
    for ki in range(k):
        d = int(dilations[ki])
        p = ((ker_len - 1) * d) // 2
        for to in range(t):
            for j in range(ker_len):
                ti = to + j * d - p
                if 0 <= ti < t:
                    mat[ki, ti, to] += float(weights[ki, j])
    return mat


def build_params(key):
    modules = []
    for m in range(NUM_RBP_MODULES):
        key, k_w, k_b = jax.random.split(key, 3)
        rk_w = jax.random.normal(k_w, (NUM_KERNELS, KERNEL_LEN), jnp.float32)
        rk_w = rk_w - jnp.mean(rk_w, axis=1, keepdims=True)            # ROCKET mean-centering
        rk_b = jax.random.uniform(k_b, (NUM_KERNELS,), jnp.float32, -1.0, 1.0)
        dils = [DILATIONS[i % len(DILATIONS)] for i in range(NUM_KERNELS)]

        toep3 = make_toeplitz3d(np.asarray(rk_w), dils, T, KERNEL_LEN)           # (K, T, T)
        toep2d = np.transpose(toep3, (1, 0, 2)).reshape(T, NUM_KERNELS * T)      # (T, K*T)

        splits = []
        for s, r in enumerate(NUM_REGIONS_PER_SPLIT):
            key, k_fw, k_fb = jax.random.split(key, 3)
            fc_w = 0.1 * jax.random.normal(k_fw, (r, 2 * NUM_KERNELS), jnp.float32)
            fc_b = 0.1 * jax.random.normal(k_fb, (r, 1), jnp.float32)
            mask = np.zeros((r, C), np.float32)
            for c in range(C):
                mask[(c + s + m) % r, c] = 1.0                         # deterministic region split
            splits.append({"w": fc_w, "b": fc_b, "mask": jnp.asarray(mask), "num_regions": r})

        modules.append({
            "num_kernels": NUM_KERNELS,
            "toeplitz3d": jnp.asarray(toep3),                          # f32, reference only
            "rocket_bias": rk_b,                                       # (K,)
            "toeplitz2d": toep2d,                                      # np, (T, K*T)
            "splits": splits,
        })

    # ---- fuse all modules into a single stacked parameter set for the kernel
    ktot = sum(mod["num_kernels"] for mod in modules)
    toep2d_all = np.concatenate([mod["toeplitz2d"] for mod in modules], axis=1)  # (T, Ktot*T)
    bias_all = np.concatenate([np.asarray(mod["rocket_bias"]) for mod in modules])  # (Ktot,)
    r_all = sum(sp["num_regions"] for mod in modules for sp in mod["splits"])

    w_all = np.zeros((r_all, 2 * ktot), np.float32)   # block-diag over the feature axis
    mask_rows, split_slices = [], []
    ro, ko = 0, 0
    for mod in modules:
        km = mod["num_kernels"]
        for sp in mod["splits"]:
            r = sp["num_regions"]
            fw = np.asarray(sp["w"])
            w_all[ro:ro + r, ko:ko + km] = fw[:, :km]                  # PPV weights
            w_all[ro:ro + r, ktot + ko:ktot + ko + km] = fw[:, km:]    # max weights
            mask_rows.append(np.asarray(sp["mask"]))
            split_slices.append((ro, r))
            ro += r
        ko += km
    mask_all = np.concatenate(mask_rows, axis=0)                       # (R_all, C)

    fused = {
        "num_kernels_total": ktot,
        "toeplitz2d": jnp.asarray(toep2d_all, dtype=jnp.bfloat16),     # bf16 MXU weights
        "bias_all": jnp.asarray(bias_all, dtype=jnp.float32),          # (Ktot,) -> SMEM
        "w_all": jnp.asarray(w_all),                                   # (R_all, 2*Ktot)
        "mask_all": jnp.asarray(mask_all),                             # (R_all, C)
        "split_slices": tuple(split_slices),
    }
    return modules, fused, key


# ----------------------------------------------------------------------------- pure-JAX reference
def reference_forward(x, modules):
    outs = []
    for mp in modules:
        toep3 = mp["toeplitz3d"]                                       # (K, T, T) f32
        bias = jnp.asarray(mp["rocket_bias"])                          # (K,)
        y = jnp.einsum("bct,kts->bkcs", x, toep3) + bias[None, :, None, None]   # (B,K,C,T)
        ppv = jnp.mean((y > 0).astype(jnp.float32), axis=-1)           # (B, K, C)
        mx = jnp.max(y, axis=-1)                                       # (B, K, C)
        feat = jnp.concatenate([jnp.transpose(ppv, (0, 2, 1)),
                                jnp.transpose(mx, (0, 2, 1))], axis=-1)          # (B, C, 2K)
        for sp in mp["splits"]:
            # includes the FC bias, which the kernel drops (softmax-invariant)
            logits = jnp.einsum("rf,bcf->brc", sp["w"], feat) + sp["b"][None]
            logits = jnp.where(sp["mask"][None] > 0, logits, -1e30)
            e = jnp.exp(logits - jnp.max(logits, axis=-1, keepdims=True)) * sp["mask"][None]
            attn = e / jnp.sum(e, axis=-1, keepdims=True)
            outs.append(jnp.einsum("brc,bct->brt", attn, x))
    return tuple(outs)


# ----------------------------------------------------------------------------- main
if __name__ == "__main__":
    root_key = jax.random.PRNGKey(0)
    modules, fused, root_key = build_params(root_key)
    root_key, k_x = jax.random.split(root_key)
    x = jax.random.normal(k_x, (B, C, T), jnp.float32)   # single dataset in input_tensors

    outputs = region_based_pooling_forward(
        x, fused["toeplitz2d"], fused["bias_all"], fused["w_all"], fused["mask_all"],
        num_kernels_total=fused["num_kernels_total"], split_slices=fused["split_slices"])
    outputs = tuple(jax.block_until_ready(o) for o in outputs)

    refs = reference_forward(x, modules)
    assert len(outputs) == NUM_RBP_MODULES * len(NUM_REGIONS_PER_SPLIT)
    for out, ref, r in zip(outputs, refs,
                           list(NUM_REGIONS_PER_SPLIT) * NUM_RBP_MODULES):
        assert out.shape == (B, r, T), out.shape
        np.testing.assert_allclose(np.asarray(out), np.asarray(ref), rtol=5e-2, atol=5e-2)

    print("KERNEL_OK")
</pallas_src>

<mosaic_0001>
module attributes {stable_mosaic.version = 11 : i64} {
  func.func @fused_rbp_kernel(%arg0: i32, %arg1: memref<1x16x128xf32, #tpu.memory_space<vmem>>, %arg2: memref<128x2048xbf16, #tpu.memory_space<vmem>>, %arg3: memref<16xf32, #tpu.memory_space<smem>>, %arg4: memref<24x32xf32, #tpu.memory_space<vmem>>, %arg5: memref<24x16xf32, #tpu.memory_space<vmem>>, %arg6: memref<1x24x128xf32, #tpu.memory_space<vmem>>) attributes {dimension_semantics = [#tpu.dimension_semantics<parallel>], iteration_bounds = array<i64: 2>, scalar_prefetch = 0 : i64, scratch_operands = 0 : i64, tpu.core_type = #tpu.core_type<tc>, window_params = [{transform_indices = @transform_0, window_bounds = array<i64: 1, 16, 128>}, {pipeline_mode = #tpu.pipeline_mode<synchronous>, transform_indices = @transform_1, window_bounds = array<i64: 128, 2048>}, {transform_indices = @transform_2, window_bounds = array<i64: 16>}, {pipeline_mode = #tpu.pipeline_mode<synchronous>, transform_indices = @transform_3, window_bounds = array<i64: 24, 32>}, {pipeline_mode = #tpu.pipeline_mode<synchronous>, transform_indices = @transform_4, window_bounds = array<i64: 24, 16>}, {transform_indices = @transform_5, window_bounds = array<i64: 1, 24, 128>}]} {
    %c0 = arith.constant 0 : index
    %c0_0 = arith.constant 0 : index
    %c0_1 = arith.constant 0 : index
    %0 = vector.load %arg1[%c0, %c0_0, %c0_1] : memref<1x16x128xf32, #tpu.memory_space<vmem>>, vector<1x16x128xf32>
    %1 = vector.shape_cast %0 : vector<1x16x128xf32> to vector<16x128xf32>
    %2 = arith.truncf %1 : vector<16x128xf32> to vector<16x128xbf16>
    %c0_2 = arith.constant 0 : index
    %c0_3 = arith.constant 0 : index
    %3 = vector.load %arg2[%c0_2, %c0_3] : memref<128x2048xbf16, #tpu.memory_space<vmem>>, vector<128x2048xbf16>
    %cst = arith.constant dense<0.000000e+00> : vector<16x2048xf32>
    %4 = tpu.matmul %2, %3, %cst {dimension_numbers = #tpu.dot_dimension_numbers<[1], [0], [0], [1], [0, 0, 1, 1], [], []>} : vector<16x128xbf16>, vector<128x2048xbf16>, vector<16x2048xf32> -> vector<16x2048xf32>
    %c0_4 = arith.constant 0 : index
    %5 = memref.load %arg3[%c0_4] : memref<16xf32, #tpu.memory_space<smem>>
    %6 = vector.extract_strided_slice %4 {offsets = [0, 0], sizes = [16, 128], strides = [1, 1]} : vector<16x2048xf32> to vector<16x128xf32>
    %cst_5 = arith.constant 0.000000e+00 : f32
    %7 = arith.subf %cst_5, %5 : f32
    %8 = vector.broadcast %7 : f32 to vector<16x128xf32>
    %9 = arith.cmpf ogt, %6, %8 : vector<16x128xf32>
    %10 = arith.extui %9 : vector<16x128xi1> to vector<16x128xi32>
    %11 = arith.sitofp %10 : vector<16x128xi32> to vector<16x128xf32>
    %cst_6 = arith.constant dense<0.000000e+00> : vector<16xf32>
    %12 = vector.multi_reduction <add>, %11, %cst_6 [1] : vector<16x128xf32> to vector<16xf32>
    %13 = vector.shape_cast %12 : vector<16xf32> to vector<16x1xf32>
    %cst_7 = arith.constant 1.280000e+02 : f32
    %14 = vector.broadcast %cst_7 : f32 to vector<16x1xf32>
    %15 = arith.divf %13, %14 : vector<16x1xf32>
    %cst_8 = arith.constant dense<0xFF800000> : vector<16xf32>
    %16 = vector.multi_reduction <maximumf>, %6, %cst_8 [1] : vector<16x128xf32> to vector<16xf32>
    %17 = vector.shape_cast %16 : vector<16xf32> to vector<16x1xf32>
    %18 = vector.broadcast %5 : f32 to vector<16x1xf32>
    %19 = arith.addf %17, %18 : vector<16x1xf32>
    %c1 = arith.constant 1 : index
    %20 = memref.load %arg3[%c1] : memref<16xf32, #tpu.memory_space<smem>>
    %21 = vector.extract_strided_slice %4 {offsets = [0, 128], sizes = [16, 128], strides = [1, 1]} : vector<16x2048xf32> to vector<16x128xf32>
    %cst_9 = arith.constant 0.000000e+00 : f32
    %22 = arith.subf %cst_9, %20 : f32
    %23 = vector.broadcast %22 : f32 to vector<16x128xf32>
    %24 = arith.cmpf ogt, %21, %23 : vector<16x128xf32>
    %25 = arith.extui %24 : vector<16x128xi1> to vector<16x128xi32>
    %26 = arith.sitofp %25 : vector<16x128xi32> to vector<16x128xf32>
    %cst_10 = arith.constant dense<0.000000e+00> : vector<16xf32>
    %27 = vector.multi_reduction <add>, %26, %cst_10 [1] : vector<16x128xf32> to vector<16xf32>
    %28 = vector.shape_cast %27 : vector<16xf32> to vector<16x1xf32>
    %cst_11 = arith.constant 1.280000e+02 : f32
    %29 = vector.broadcast %cst_11 : f32 to vector<16x1xf32>
    %30 = arith.divf %28, %29 : vector<16x1xf32>
    %cst_12 = arith.constant dense<0xFF800000> : vector<16xf32>
    %31 = vector.multi_reduction <maximumf>, %21, %cst_12 [1] : vector<16x128xf32> to vector<16xf32>
    %32 = vector.shape_cast %31 : vector<16xf32> to vector<16x1xf32>
    %33 = vector.broadcast %20 : f32 to vector<16x1xf32>
    %34 = arith.addf %32, %33 : vector<16x1xf32>
    %c2 = arith.constant 2 : index
    %35 = memref.load %arg3[%c2] : memref<16xf32, #tpu.memory_space<smem>>
    %36 = vector.extract_strided_slice %4 {offsets = [0, 256], sizes = [16, 128], strides = [1, 1]} : vector<16x2048xf32> to vector<16x128xf32>
    %cst_13 = arith.constant 0.000000e+00 : f32
    %37 = arith.subf %cst_13, %35 : f32
    %38 = vector.broadcast %37 : f32 to vector<16x128xf32>
    %39 = arith.cmpf ogt, %36, %38 : vector<16x128xf32>
    %40 = arith.extui %39 : vector<16x128xi1> to vector<16x128xi32>
    %41 = arith.sitofp %40 : vector<16x128xi32> to vector<16x128xf32>
    %cst_14 = arith.constant dense<0.000000e+00> : vector<16xf32>
    %42 = vector.multi_reduction <add>, %41, %cst_14 [1] : vector<16x128xf32> to vector<16xf32>
    %43 = vector.shape_cast %42 : vector<16xf32> to vector<16x1xf32>
    %cst_15 = arith.constant 1.280000e+02 : f32
    %44 = vector.broadcast %cst_15 : f32 to vector<16x1xf32>
    %45 = arith.divf %43, %44 : vector<16x1xf32>
    %cst_16 = arith.constant dense<0xFF800000> : vector<16xf32>
    %46 = vector.multi_reduction <maximumf>, %36, %cst_16 [1] : vector<16x128xf32> to vector<16xf32>
    %47 = vector.shape_cast %46 : vector<16xf32> to vector<16x1xf32>
    %48 = vector.broadcast %35 : f32 to vector<16x1xf32>
    %49 = arith.addf %47, %48 : vector<16x1xf32>
    %c3 = arith.constant 3 : index
    %50 = memref.load %arg3[%c3] : memref<16xf32, #tpu.memory_space<smem>>
    %51 = vector.extract_strided_slice %4 {offsets = [0, 384], sizes = [16, 128], strides = [1, 1]} : vector<16x2048xf32> to vector<16x128xf32>
    %cst_17 = arith.constant 0.000000e+00 : f32
    %52 = arith.subf %cst_17, %50 : f32
    %53 = vector.broadcast %52 : f32 to vector<16x128xf32>
    %54 = arith.cmpf ogt, %51, %53 : vector<16x128xf32>
    %55 = arith.extui %54 : vector<16x128xi1> to vector<16x128xi32>
    %56 = arith.sitofp %55 : vector<16x128xi32> to vector<16x128xf32>
    %cst_18 = arith.constant dense<0.000000e+00> : vector<16xf32>
    %57 = vector.multi_reduction <add>, %56, %cst_18 [1] : vector<16x128xf32> to vector<16xf32>
    %58 = vector.shape_cast %57 : vector<16xf32> to vector<16x1xf32>
    %cst_19 = arith.constant 1.280000e+02 : f32
    %59 = vector.broadcast %cst_19 : f32 to vector<16x1xf32>
    %60 = arith.divf %58, %59 : vector<16x1xf32>
    %cst_20 = arith.constant dense<0xFF800000> : vector<16xf32>
    %61 = vector.multi_reduction <maximumf>, %51, %cst_20 [1] : vector<16x128xf32> to vector<16xf32>
    %62 = vector.shape_cast %61 : vector<16xf32> to vector<16x1xf32>
    %63 = vector.broadcast %50 : f32 to vector<16x1xf32>
    %64 = arith.addf %62, %63 : vector<16x1xf32>
    %c4 = arith.constant 4 : index
    %65 = memref.load %arg3[%c4] : memref<16xf32, #tpu.memory_space<smem>>
    %66 = vector.extract_strided_slice %4 {offsets = [0, 512], sizes = [16, 128], strides = [1, 1]} : vector<16x2048xf32> to vector<16x128xf32>
    %cst_21 = arith.constant 0.000000e+00 : f32
    %67 = arith.subf %cst_21, %65 : f32
    %68 = vector.broadcast %67 : f32 to vector<16x128xf32>
    %69 = arith.cmpf ogt, %66, %68 : vector<16x128xf32>
    %70 = arith.extui %69 : vector<16x128xi1> to vector<16x128xi32>
    %71 = arith.sitofp %70 : vector<16x128xi32> to vector<16x128xf32>
    %cst_22 = arith.constant dense<0.000000e+00> : vector<16xf32>
    %72 = vector.multi_reduction <add>, %71, %cst_22 [1] : vector<16x128xf32> to vector<16xf32>
    %73 = vector.shape_cast %72 : vector<16xf32> to vector<16x1xf32>
    %cst_23 = arith.constant 1.280000e+02 : f32
    %74 = vector.broadcast %cst_23 : f32 to vector<16x1xf32>
    %75 = arith.divf %73, %74 : vector<16x1xf32>
    %cst_24 = arith.constant dense<0xFF800000> : vector<16xf32>
    %76 = vector.multi_reduction <maximumf>, %66, %cst_24 [1] : vector<16x128xf32> to vector<16xf32>
    %77 = vector.shape_cast %76 : vector<16xf32> to vector<16x1xf32>
    %78 = vector.broadcast %65 : f32 to vector<16x1xf32>
    %79 = arith.addf %77, %78 : vector<16x1xf32>
    %c5 = arith.constant 5 : index
    %80 = memref.load %arg3[%c5] : memref<16xf32, #tpu.memory_space<smem>>
    %81 = vector.extract_strided_slice %4 {offsets = [0, 640], sizes = [16, 128], strides = [1, 1]} : vector<16x2048xf32> to vector<16x128xf32>
    %cst_25 = arith.constant 0.000000e+00 : f32
    %82 = arith.subf %cst_25, %80 : f32
    %83 = vector.broadcast %82 : f32 to vector<16x128xf32>
    %84 = arith.cmpf ogt, %81, %83 : vector<16x128xf32>
    %85 = arith.extui %84 : vector<16x128xi1> to vector<16x128xi32>
    %86 = arith.sitofp %85 : vector<16x128xi32> to vector<16x128xf32>
    %cst_26 = arith.constant dense<0.000000e+00> : vector<16xf32>
    %87 = vector.multi_reduction <add>, %86, %cst_26 [1] : vector<16x128xf32> to vector<16xf32>
    %88 = vector.shape_cast %87 : vector<16xf32> to vector<16x1xf32>
    %cst_27 = arith.constant 1.280000e+02 : f32
    %89 = vector.broadcast %cst_27 : f32 to vector<16x1xf32>
    %90 = arith.divf %88, %89 : vector<16x1xf32>
    %cst_28 = arith.constant dense<0xFF800000> : vector<16xf32>
    %91 = vector.multi_reduction <maximumf>, %81, %cst_28 [1] : vector<16x128xf32> to vector<16xf32>
    %92 = vector.shape_cast %91 : vector<16xf32> to vector<16x1xf32>
    %93 = vector.broadcast %80 : f32 to vector<16x1xf32>
    %94 = arith.addf %92, %93 : vector<16x1xf32>
    %c6 = arith.constant 6 : index
    %95 = memref.load %arg3[%c6] : memref<16xf32, #tpu.memory_space<smem>>
    %96 = vector.extract_strided_slice %4 {offsets = [0, 768], sizes = [16, 128], strides = [1, 1]} : vector<16x2048xf32> to vector<16x128xf32>
    %cst_29 = arith.constant 0.000000e+00 : f32
    %97 = arith.subf %cst_29, %95 : f32
    %98 = vector.broadcast %97 : f32 to vector<16x128xf32>
    %99 = arith.cmpf ogt, %96, %98 : vector<16x128xf32>
    %100 = arith.extui %99 : vector<16x128xi1> to vector<16x128xi32>
    %101 = arith.sitofp %100 : vector<16x128xi32> to vector<16x128xf32>
    %cst_30 = arith.constant dense<0.000000e+00> : vector<16xf32>
    %102 = vector.multi_reduction <add>, %101, %cst_30 [1] : vector<16x128xf32> to vector<16xf32>
    %103 = vector.shape_cast %102 : vector<16xf32> to vector<16x1xf32>
    %cst_31 = arith.constant 1.280000e+02 : f32
    %104 = vector.broadcast %cst_31 : f32 to vector<16x1xf32>
    %105 = arith.divf %103, %104 : vector<16x1xf32>
    %cst_32 = arith.constant dense<0xFF800000> : vector<16xf32>
    %106 = vector.multi_reduction <maximumf>, %96, %cst_32 [1] : vector<16x128xf32> to vector<16xf32>
    %107 = vector.shape_cast %106 : vector<16xf32> to vector<16x1xf32>
    %108 = vector.broadcast %95 : f32 to vector<16x1xf32>
    %109 = arith.addf %107, %108 : vector<16x1xf32>
    %c7 = arith.constant 7 : index
    %110 = memref.load %arg3[%c7] : memref<16xf32, #tpu.memory_space<smem>>
    %111 = vector.extract_strided_slice %4 {offsets = [0, 896], sizes = [16, 128], strides = [1, 1]} : vector<16x2048xf32> to vector<16x128xf32>
    %cst_33 = arith.constant 0.000000e+00 : f32
    %112 = arith.subf %cst_33, %110 : f32
    %113 = vector.broadcast %112 : f32 to vector<16x128xf32>
    %114 = arith.cmpf ogt, %111, %113 : vector<16x128xf32>
    %115 = arith.extui %114 : vector<16x128xi1> to vector<16x128xi32>
    %116 = arith.sitofp %115 : vector<16x128xi32> to vector<16x128xf32>
    %cst_34 = arith.constant dense<0.000000e+00> : vector<16xf32>
    %117 = vector.multi_reduction <add>, %116, %cst_34 [1] : vector<16x128xf32> to vector<16xf32>
    %118 = vector.shape_cast %117 : vector<16xf32> to vector<16x1xf32>
    %cst_35 = arith.constant 1.280000e+02 : f32
    %119 = vector.broadcast %cst_35 : f32 to vector<16x1xf32>
    %120 = arith.divf %118, %119 : vector<16x1xf32>
    %cst_36 = arith.constant dense<0xFF800000> : vector<16xf32>
    %121 = vector.multi_reduction <maximumf>, %111, %cst_36 [1] : vector<16x128xf32> to vector<16xf32>
    %122 = vector.shape_cast %121 : vector<16xf32> to vector<16x1xf32>
    %123 = vector.broadcast %110 : f32 to vector<16x1xf32>
    %124 = arith.addf %122, %123 : vector<16x1xf32>
    %c8 = arith.constant 8 : index
    %125 = memref.load %arg3[%c8] : memref<16xf32, #tpu.memory_space<smem>>
    %126 = vector.extract_strided_slice %4 {offsets = [0, 1024], sizes = [16, 128], strides = [1, 1]} : vector<16x2048xf32> to vector<16x128xf32>
    %cst_37 = arith.constant 0.000000e+00 : f32
    %127 = arith.subf %cst_37, %125 : f32
    %128 = vector.broadcast %127 : f32 to vector<16x128xf32>
    %129 = arith.cmpf ogt, %126, %128 : vector<16x128xf32>
    %130 = arith.extui %129 : vector<16x128xi1> to vector<16x128xi32>
    %131 = arith.sitofp %130 : vector<16x128xi32> to vector<16x128xf32>
    %cst_38 = arith.constant dense<0.000000e+00> : vector<16xf32>
    %132 = vector.multi_reduction <add>, %131, %cst_38 [1] : vector<16x128xf32> to vector<16xf32>
    %133 = vector.shape_cast %132 : vector<16xf32> to vector<16x1xf32>
    %cst_39 = arith.constant 1.280000e+02 : f32
    %134 = vector.broadcast %cst_39 : f32 to vector<16x1xf32>
    %135 = arith.divf %133, %134 : vector<16x1xf32>
    %cst_40 = arith.constant dense<0xFF800000> : vector<16xf32>
    %136 = vector.multi_reduction <maximumf>, %126, %cst_40 [1] : vector<16x128xf32> to vector<16xf32>
    %137 = vector.shape_cast %136 : vector<16xf32> to vector<16x1xf32>
    %138 = vector.broadcast %125 : f32 to vector<16x1xf32>
    %139 = arith.addf %137, %138 : vector<16x1xf32>
    %c9 = arith.constant 9 : index
    %140 = memref.load %arg3[%c9] : memref<16xf32, #tpu.memory_space<smem>>
    %141 = vector.extract_strided_slice %4 {offsets = [0, 1152], sizes = [16, 128], strides = [1, 1]} : vector<16x2048xf32> to vector<16x128xf32>
    %cst_41 = arith.constant 0.000000e+00 : f32
    %142 = arith.subf %cst_41, %140 : f32
    %143 = vector.broadcast %142 : f32 to vector<16x128xf32>
    %144 = arith.cmpf ogt, %141, %143 : vector<16x128xf32>
    %145 = arith.extui %144 : vector<16x128xi1> to vector<16x128xi32>
    %146 = arith.sitofp %145 : vector<16x128xi32> to vector<16x128xf32>
    %cst_42 = arith.constant dense<0.000000e+00> : vector<16xf32>
    %147 = vector.multi_reduction <add>, %146, %cst_42 [1] : vector<16x128xf32> to vector<16xf32>
    %148 = vector.shape_cast %147 : vector<16xf32> to vector<16x1xf32>
    %cst_43 = arith.constant 1.280000e+02 : f32
    %149 = vector.broadcast %cst_43 : f32 to vector<16x1xf32>
    %150 = arith.divf %148, %149 : vector<16x1xf32>
    %cst_44 = arith.constant dense<0xFF800000> : vector<16xf32>
    %151 = vector.multi_reduction <maximumf>, %141, %cst_44 [1] : vector<16x128xf32> to vector<16xf32>
    %152 = vector.shape_cast %151 : vector<16xf32> to vector<16x1xf32>
    %153 = vector.broadcast %140 : f32 to vector<16x1xf32>
    %154 = arith.addf %152, %153 : vector<16x1xf32>
    %c10 = arith.constant 10 : index
    %155 = memref.load %arg3[%c10] : memref<16xf32, #tpu.memory_space<smem>>
    %156 = vector.extract_strided_slice %4 {offsets = [0, 1280], sizes = [16, 128], strides = [1, 1]} : vector<16x2048xf32> to vector<16x128xf32>
    %cst_45 = arith.constant 0.000000e+00 : f32
    %157 = arith.subf %cst_45, %155 : f32
    %158 = vector.broadcast %157 : f32 to vector<16x128xf32>
    %159 = arith.cmpf ogt, %156, %158 : vector<16x128xf32>
    %160 = arith.extui %159 : vector<16x128xi1> to vector<16x128xi32>
    %161 = arith.sitofp %160 : vector<16x128xi32> to vector<16x128xf32>
    %cst_46 = arith.constant dense<0.000000e+00> : vector<16xf32>
    %162 = vector.multi_reduction <add>, %161, %cst_46 [1] : vector<16x128xf32> to vector<16xf32>
    %163 = vector.shape_cast %162 : vector<16xf32> to vector<16x1xf32>
    %cst_47 = arith.constant 1.280000e+02 : f32
    %164 = vector.broadcast %cst_47 : f32 to vector<16x1xf32>
    %165 = arith.divf %163, %164 : vector<16x1xf32>
    %cst_48 = arith.constant dense<0xFF800000> : vector<16xf32>
    %166 = vector.multi_reduction <maximumf>, %156, %cst_48 [1] : vector<16x128xf32> to vector<16xf32>
    %167 = vector.shape_cast %166 : vector<16xf32> to vector<16x1xf32>
    %168 = vector.broadcast %155 : f32 to vector<16x1xf32>
    %169 = arith.addf %167, %168 : vector<16x1xf32>
    %c11 = arith.constant 11 : index
    %170 = memref.load %arg3[%c11] : memref<16xf32, #tpu.memory_space<smem>>
    %171 = vector.extract_strided_slice %4 {offsets = [0, 1408], sizes = [16, 128], strides = [1, 1]} : vector<16x2048xf32> to vector<16x128xf32>
    %cst_49 = arith.constant 0.000000e+00 : f32
    %172 = arith.subf %cst_49, %170 : f32
    %173 = vector.broadcast %172 : f32 to vector<16x128xf32>
    %174 = arith.cmpf ogt, %171, %173 : vector<16x128xf32>
    %175 = arith.extui %174 : vector<16x128xi1> to vector<16x128xi32>
    %176 = arith.sitofp %175 : vector<16x128xi32> to vector<16x128xf32>
    %cst_50 = arith.constant dense<0.000000e+00> : vector<16xf32>
    %177 = vector.multi_reduction <add>, %176, %cst_50 [1] : vector<16x128xf32> to vector<16xf32>
    %178 = vector.shape_cast %177 : vector<16xf32> to vector<16x1xf32>
    %cst_51 = arith.constant 1.280000e+02 : f32
    %179 = vector.broadcast %cst_51 : f32 to vector<16x1xf32>
    %180 = arith.divf %178, %179 : vector<16x1xf32>
    %cst_52 = arith.constant dense<0xFF800000> : vector<16xf32>
    %181 = vector.multi_reduction <maximumf>, %171, %cst_52 [1] : vector<16x128xf32> to vector<16xf32>
    %182 = vector.shape_cast %181 : vector<16xf32> to vector<16x1xf32>
    %183 = vector.broadcast %170 : f32 to vector<16x1xf32>
    %184 = arith.addf %182, %183 : vector<16x1xf32>
    %c12 = arith.constant 12 : index
    %185 = memref.load %arg3[%c12] : memref<16xf32, #tpu.memory_space<smem>>
    %186 = vector.extract_strided_slice %4 {offsets = [0, 1536], sizes = [16, 128], strides = [1, 1]} : vector<16x2048xf32> to vector<16x128xf32>
    %cst_53 = arith.constant 0.000000e+00 : f32
    %187 = arith.subf %cst_53, %185 : f32
    %188 = vector.broadcast %187 : f32 to vector<16x128xf32>
    %189 = arith.cmpf ogt, %186, %188 : vector<16x128xf32>
    %190 = arith.extui %189 : vector<16x128xi1> to vector<16x128xi32>
    %191 = arith.sitofp %190 : vector<16x128xi32> to vector<16x128xf32>
    %cst_54 = arith.constant dense<0.000000e+00> : vector<16xf32>
    %192 = vector.multi_reduction <add>, %191, %cst_54 [1] : vector<16x128xf32> to vector<16xf32>
    %193 = vector.shape_cast %192 : vector<16xf32> to vector<16x1xf32>
    %cst_55 = arith.constant 1.280000e+02 : f32
    %194 = vector.broadcast %cst_55 : f32 to vector<16x1xf32>
    %195 = arith.divf %193, %194 : vector<16x1xf32>
    %cst_56 = arith.constant dense<0xFF800000> : vector<16xf32>
    %196 = vector.multi_reduction <maximumf>, %186, %cst_56 [1] : vector<16x128xf32> to vector<16xf32>
    %197 = vector.shape_cast %196 : vector<16xf32> to vector<16x1xf32>
    %198 = vector.broadcast %185 : f32 to vector<16x1xf32>
    %199 = arith.addf %197, %198 : vector<16x1xf32>
    %c13 = arith.constant 13 : index
    %200 = memref.load %arg3[%c13] : memref<16xf32, #tpu.memory_space<smem>>
    %201 = vector.extract_strided_slice %4 {offsets = [0, 1664], sizes = [16, 128], strides = [1, 1]} : vector<16x2048xf32> to vector<16x128xf32>
    %cst_57 = arith.constant 0.000000e+00 : f32
    %202 = arith.subf %cst_57, %200 : f32
    %203 = vector.broadcast %202 : f32 to vector<16x128xf32>
    %204 = arith.cmpf ogt, %201, %203 : vector<16x128xf32>
    %205 = arith.extui %204 : vector<16x128xi1> to vector<16x128xi32>
    %206 = arith.sitofp %205 : vector<16x128xi32> to vector<16x128xf32>
    %cst_58 = arith.constant dense<0.000000e+00> : vector<16xf32>
    %207 = vector.multi_reduction <add>, %206, %cst_58 [1] : vector<16x128xf32> to vector<16xf32>
    %208 = vector.shape_cast %207 : vector<16xf32> to vector<16x1xf32>
    %cst_59 = arith.constant 1.280000e+02 : f32
    %209 = vector.broadcast %cst_59 : f32 to vector<16x1xf32>
    %210 = arith.divf %208, %209 : vector<16x1xf32>
    %cst_60 = arith.constant dense<0xFF800000> : vector<16xf32>
    %211 = vector.multi_reduction <maximumf>, %201, %cst_60 [1] : vector<16x128xf32> to vector<16xf32>
    %212 = vector.shape_cast %211 : vector<16xf32> to vector<16x1xf32>
    %213 = vector.broadcast %200 : f32 to vector<16x1xf32>
    %214 = arith.addf %212, %213 : vector<16x1xf32>
    %c14 = arith.constant 14 : index
    %215 = memref.load %arg3[%c14] : memref<16xf32, #tpu.memory_space<smem>>
    %216 = vector.extract_strided_slice %4 {offsets = [0, 1792], sizes = [16, 128], strides = [1, 1]} : vector<16x2048xf32> to vector<16x128xf32>
    %cst_61 = arith.constant 0.000000e+00 : f32
    %217 = arith.subf %cst_61, %215 : f32
    %218 = vector.broadcast %217 : f32 to vector<16x128xf32>
    %219 = arith.cmpf ogt, %216, %218 : vector<16x128xf32>
    %220 = arith.extui %219 : vector<16x128xi1> to vector<16x128xi32>
    %221 = arith.sitofp %220 : vector<16x128xi32> to vector<16x128xf32>
    %cst_62 = arith.constant dense<0.000000e+00> : vector<16xf32>
    %222 = vector.multi_reduction <add>, %221, %cst_62 [1] : vector<16x128xf32> to vector<16xf32>
    %223 = vector.shape_cast %222 : vector<16xf32> to vector<16x1xf32>
    %cst_63 = arith.constant 1.280000e+02 : f32
    %224 = vector.broadcast %cst_63 : f32 to vector<16x1xf32>
    %225 = arith.divf %223, %224 : vector<16x1xf32>
    %cst_64 = arith.constant dense<0xFF800000> : vector<16xf32>
    %226 = vector.multi_reduction <maximumf>, %216, %cst_64 [1] : vector<16x128xf32> to vector<16xf32>
    %227 = vector.shape_cast %226 : vector<16xf32> to vector<16x1xf32>
    %228 = vector.broadcast %215 : f32 to vector<16x1xf32>
    %229 = arith.addf %227, %228 : vector<16x1xf32>
    %c15 = arith.constant 15 : index
    %230 = memref.load %arg3[%c15] : memref<16xf32, #tpu.memory_space<smem>>
    %231 = vector.extract_strided_slice %4 {offsets = [0, 1920], sizes = [16, 128], strides = [1, 1]} : vector<16x2048xf32> to vector<16x128xf32>
    %cst_65 = arith.constant 0.000000e+00 : f32
    %232 = arith.subf %cst_65, %230 : f32
    %233 = vector.broadcast %232 : f32 to vector<16x128xf32>
    %234 = arith.cmpf ogt, %231, %233 : vector<16x128xf32>
    %235 = arith.extui %234 : vector<16x128xi1> to vector<16x128xi32>
    %236 = arith.sitofp %235 : vector<16x128xi32> to vector<16x128xf32>
    %cst_66 = arith.constant dense<0.000000e+00> : vector<16xf32>
    %237 = vector.multi_reduction <add>, %236, %cst_66 [1] : vector<16x128xf32> to vector<16xf32>
    %238 = vector.shape_cast %237 : vector<16xf32> to vector<16x1xf32>
    %cst_67 = arith.constant 1.280000e+02 : f32
    %239 = vector.broadcast %cst_67 : f32 to vector<16x1xf32>
    %240 = arith.divf %238, %239 : vector<16x1xf32>
    %cst_68 = arith.constant dense<0xFF800000> : vector<16xf32>
    %241 = vector.multi_reduction <maximumf>, %231, %cst_68 [1] : vector<16x128xf32> to vector<16xf32>
    %242 = vector.shape_cast %241 : vector<16xf32> to vector<16x1xf32>
    %243 = vector.broadcast %230 : f32 to vector<16x1xf32>
    %244 = arith.addf %242, %243 : vector<16x1xf32>
    %245 = tpu.concatenate %15, %30, %45, %60, %75, %90, %105, %120, %135, %150, %165, %180, %195, %210, %225, %240 in 1 : vector<16x1xf32>, vector<16x1xf32>, vector<16x1xf32>, vector<16x1xf32>, vector<16x1xf32>, vector<16x1xf32>, vector<16x1xf32>, vector<16x1xf32>, vector<16x1xf32>, vector<16x1xf32>, vector<16x1xf32>, vector<16x1xf32>, vector<16x1xf32>, vector<16x1xf32>, vector<16x1xf32>, vector<16x1xf32> -> vector<16x16xf32>
    %246 = tpu.concatenate %19, %34, %49, %64, %79, %94, %109, %124, %139, %154, %169, %184, %199, %214, %229, %244 in 1 : vector<16x1xf32>, vector<16x1xf32>, vector<16x1xf32>, vector<16x1xf32>, vector<16x1xf32>, vector<16x1xf32>, vector<16x1xf32>, vector<16x1xf32>, vector<16x1xf32>, vector<16x1xf32>, vector<16x1xf32>, vector<16x1xf32>, vector<16x1xf32>, vector<16x1xf32>, vector<16x1xf32>, vector<16x1xf32> -> vector<16x16xf32>
    %247 = tpu.concatenate %245, %246 in 1 : vector<16x16xf32>, vector<16x16xf32> -> vector<16x32xf32>
    %c0_69 = arith.constant 0 : index
    %c0_70 = arith.constant 0 : index
    %248 = vector.load %arg4[%c0_69, %c0_70] : memref<24x32xf32, #tpu.memory_space<vmem>>, vector<24x32xf32>
    %cst_71 = arith.constant dense<0.000000e+00> : vector<24x16xf32>
    %249 = tpu.matmul %248, %247, %cst_71 {dimension_numbers = #tpu.dot_dimension_numbers<[1], [1], [0], [0], [0, 0, 1, 0], [], []>} : vector<24x32xf32>, vector<16x32xf32>, vector<24x16xf32> -> vector<24x16xf32>
    %c0_72 = arith.constant 0 : index
    %c0_73 = arith.constant 0 : index
    %250 = vector.load %arg5[%c0_72, %c0_73] : memref<24x16xf32, #tpu.memory_space<vmem>>, vector<24x16xf32>
    %cst_74 = arith.constant 0.000000e+00 : f32
    %251 = vector.broadcast %cst_74 : f32 to vector<24x16xf32>
    %252 = arith.cmpf ogt, %250, %251 : vector<24x16xf32>
    %cst_75 = arith.constant -1.000000e+30 : f32
    %253 = vector.broadcast %cst_75 : f32 to vector<24x16xf32>
    %254 = arith.select %252, %249, %253 : vector<24x16xi1>, vector<24x16xf32>
    %cst_76 = arith.constant dense<0xFF800000> : vector<24xf32>
    %255 = vector.multi_reduction <maximumf>, %254, %cst_76 [1] : vector<24x16xf32> to vector<24xf32>
    %256 = vector.shape_cast %255 : vector<24xf32> to vector<24x1xf32>
    %257 = vector.broadcast %256 : vector<24x1xf32> to vector<24x16xf32>
    %258 = arith.subf %254, %257 : vector<24x16xf32>
    %259 = math.exp %258 : vector<24x16xf32>
    %260 = arith.mulf %259, %250 : vector<24x16xf32>
    %cst_77 = arith.constant dense<0.000000e+00> : vector<24xf32>
    %261 = vector.multi_reduction <add>, %260, %cst_77 [1] : vector<24x16xf32> to vector<24xf32>
    %262 = vector.shape_cast %261 : vector<24xf32> to vector<24x1xf32>
    %cst_78 = arith.constant 9.99999968E-21 : f32
    %263 = vector.broadcast %cst_78 : f32 to vector<24x1xf32>
    %264 = arith.maximumf %262, %263 : vector<24x1xf32>
    %265 = tpu.reciprocal %264 {approx = true} : vector<24x1xf32> -> vector<24x1xf32>
    %266 = vector.broadcast %265 : vector<24x1xf32> to vector<24x16xf32>
    %267 = arith.mulf %260, %266 : vector<24x16xf32>
    %cst_79 = arith.constant dense<0.000000e+00> : vector<24x128xf32>
    %268 = tpu.matmul %267, %1, %cst_79 {dimension_numbers = #tpu.dot_dimension_numbers<[1], [0], [0], [1], [0, 0, 1, 1], [], []>} : vector<24x16xf32>, vector<16x128xf32>, vector<24x128xf32> -> vector<24x128xf32>
    %c0_80 = arith.constant 0 : index
    %c0_81 = arith.constant 0 : index
    %c0_82 = arith.constant 0 : index
    %269 = vector.load %arg6[%c0_80, %c0_81, %c0_82] : memref<1x24x128xf32, #tpu.memory_space<vmem>>, vector<1x24x128xf32>
    %270 = vector.shape_cast %269 : vector<1x24x128xf32> to vector<24x128xf32>
    %271 = vector.shape_cast %268 : vector<24x128xf32> to vector<1x24x128xf32>
    tpu.vector_store %arg6[%c0_80, %c0_81, %c0_82], %271 {strides = array<i32>} : memref<1x24x128xf32, #tpu.memory_space<vmem>>, vector<1x24x128xf32>,
    return
  }
  func.func @transform_0(%arg0: i32) -> (i32, i32, i32) {
    %c0_i32 = arith.constant 0 : i32
    %c0_i32_0 = arith.constant 0 : i32
    %c0_i32_1 = arith.constant 0 : i32
    return %arg0, %c0_i32, %c0_i32_0 : i32, i32, i32
  }
  func.func @transform_1(%arg0: i32) -> (i32, i32) {
    %c0_i32 = arith.constant 0 : i32
    %c0_i32_0 = arith.constant 0 : i32
    %c0_i32_1 = arith.constant 0 : i32
    return %c0_i32, %c0_i32_0 : i32, i32
  }
  func.func @transform_2(%arg0: i32) -> i32 {
    %c0_i32 = arith.constant 0 : i32
    %c0_i32_0 = arith.constant 0 : i32
    return %c0_i32 : i32
  }
  func.func @transform_3(%arg0: i32) -> (i32, i32) {
    %c0_i32 = arith.constant 0 : i32
    %c0_i32_0 = arith.constant 0 : i32
    %c0_i32_1 = arith.constant 0 : i32
    return %c0_i32, %c0_i32_0 : i32, i32
  }
  func.func @transform_4(%arg0: i32) -> (i32, i32) {
    %c0_i32 = arith.constant 0 : i32
    %c0_i32_0 = arith.constant 0 : i32
    %c0_i32_1 = arith.constant 0 : i32
    return %c0_i32, %c0_i32_0 : i32, i32
  }
  func.func @transform_5(%arg0: i32) -> (i32, i32, i32) {
    %c0_i32 = arith.constant 0 : i32
    %c0_i32_0 = arith.constant 0 : i32
    %c0_i32_1 = arith.constant 0 : i32
    return %arg0, %c0_i32, %c0_i32_0 : i32, i32, i32
  }
}

</mosaic_0001>

<llo_original>
// kernel: region_based_pooling_forward.1
$region0: #{region_based_pooling_forward.1}
  #allocation0 [shape = 'u32[]', space=smem, size = 0x4, offset = 0x4, fixed_abs, tag = 'smem constant byte address 0x4 - core index']
  #allocation1 [shape = 'u32[72,128]{1,0:T(1,128)}', space=vmem, size = 0x9000, scoped, tag = 'internal scratch']
  %s0 = inlined_call_operand.vmem [shape: f32[2,16,128], index: 0, kind: input, shape index: {}]
  %s1 = inlined_call_operand.hbm [shape: bf16[128,2048], index: 1, kind: input, shape index: {}]
  %s2 = inlined_call_operand.vmem [shape: f32[16], index: 2, kind: input, shape index: {}]
  %s3 = inlined_call_operand.hbm [shape: f32[24,32], index: 3, kind: input, shape index: {}]
  %s4 = inlined_call_operand.vmem [shape: f32[24,16], index: 4, kind: input, shape index: {}]
  %s5 = inlined_call_operand.vmem [shape: f32[2,24,128], index: 5, kind: output, shape index: {}]
  %s6 = sld [smem:[#allocation0]]
  $region65: #{region_based_pooling_forward.1} parent=0
    _
  %s8 = ssub.s32 1, %s6
  %s9 = scalar_select 0, %s8, %s6
  $region1: #{region_based_pooling_forward.1} parent=0
    #allocation2 [shape = 'u8[524288]{0}', space=vmem, size = 0x80000, scoped, tag = 'input window, operand 1, single buffered']
    #allocation3 [shape = 's32[2]{0}', space=sflag, size = 0x8, scoped, tag = 'scoped memory for region_based_pooling_forward.1']
    #allocation4 [shape = 's32[2]{0}', space=sflag, size = 0x8, scoped, tag = 'scoped memory for region_based_pooling_forward.1']
    #allocation5 [shape = 'u8[512]{0}', space=smem, size = 0x200, scoped, tag = 'input window, operand 2, single buffered']
    #allocation6 [shape = 'u8[12288]{0}', space=vmem, size = 0x3000, scoped, tag = 'input window, operand 3, single buffered']
    #allocation7 [shape = 's32[1]{0}', space=sflag, size = 0x4, scoped, tag = 'scoped memory for region_based_pooling_forward.1']
    %10 = vsyncpa [#allocation3], 0
    %11 = vsyncpa [#allocation4], 0
    %12 = vsyncpa [#allocation7], 0
    loop: start=0, step=1, limit=4
    $region2: #{region_based_pooling_forward.1} parent=1 // loop_pre_header
      _
    $region3: #{region_based_pooling_forward.1} parent=1 // loop_header
      %s14 = sphi 0, %s18
      %p15 = scmp.ge.s32.totalorder %s14, 4
      %s24 = sphi 0, %s26
      %s27 = sphi 0, %s24
      %s28 = sphi 0, %s27
      %s44 = sphi 0, %s28
      %s48 = sphi 0, %s48
      %s50 = sphi 0, %s48
      %s51 = sphi 0, %s50
      %s65 = sphi 0, %s51
      %s69 = sphi 0, %s69
      %s71 = sphi 0, %s69
      %s72 = sphi 0, %s71
      %s86 = sphi 0, %s72
      %s90 = sphi 0, %s90
      %s92 = sphi 0, %s90
      %s93 = sphi 0, %s92
      %s107 = sphi 0, %s93
      %s111 = sphi 0, %s111
      %s113 = sphi 0, %s111
      %s114 = sphi 0, %s113
      %s128 = sphi 0, %s114
      %s134 = sphi 0, %s136
      %s137 = sphi 0, %s134
      %s138 = sphi 0, %s137
      %s154 = sphi 0, %s138
    $region4: #{region_based_pooling_forward.1} parent=1 // loop_header_branch
      %17 = sbr.rel (%p15) target = $region8
    $region5: #{region_based_pooling_forward.1} parent=1 // loop_body
      %s19 = ssub.s32 %s14, 1
      %s20 = ssub.s32 %s14, 2
      %s21 = sadd.s32 %s14, 1
      %s22 = ssub.s32 %s14, %s21
      %p23 = scmp.eq.s32.totalorder %s22, 0
      %s25 = sadd.s32 %s24, 1
      %s26 = scalar_select %p23, %s24, %s25
      %p29 = pneg %p23
      %p30 = scmp.eq.s32.totalorder %s14, 1
      %p31 = por %p29, %p30
      %p32 = scmp.ne.s32.totalorder %s24, %s27
      %p33 = scmp.eq.s32.totalorder %s14, 0
      %p34 = por %p32, %p33
      %p35 = scmp.ne.s32.totalorder %s24, %s27
      %p36 = scmp.eq.s32.totalorder %s19, 1
      %p37 = por %p35, %p36
      %p38 = scmp.ne.s32.totalorder %s27, %s28
      %p39 = scmp.eq.s32.totalorder %s19, 0
      %p40 = por %p38, %p39
      %p41 = scmp.ne.s32.totalorder %s27, %s28
      %p42 = scmp.eq.s32.totalorder %s20, 1
      %p43 = por %p41, %p42
      %p45 = scmp.ne.s32.totalorder %s28, %s44
      %p46 = scmp.eq.s32.totalorder %s20, 0
      %p47 = por %p45, %p46
      %s49 = sadd.s32 %s48, 1
      %p52 = scmp.eq.s32.totalorder %s14, 1
      %p53 = scmp.ne.s32.totalorder %s48, %s50
      %p54 = scmp.eq.s32.totalorder %s14, 0
      %p55 = por %p53, %p54
      %p56 = scmp.ne.s32.totalorder %s48, %s50
      %p57 = scmp.eq.s32.totalorder %s19, 1
      %p58 = por %p56, %p57
      %p59 = scmp.ne.s32.totalorder %s50, %s51
      %p60 = scmp.eq.s32.totalorder %s19, 0
      %p61 = por %p59, %p60
      %p62 = scmp.ne.s32.totalorder %s50, %s51
      %p63 = scmp.eq.s32.totalorder %s20, 1
      %p64 = por %p62, %p63
      %p66 = scmp.ne.s32.totalorder %s51, %s65
      %p67 = scmp.eq.s32.totalorder %s20, 0
      %p68 = por %p66, %p67
      %s70 = sadd.s32 %s69, 1
      %p73 = scmp.eq.s32.totalorder %s14, 1
      %p74 = scmp.ne.s32.totalorder %s69, %s71
      %p75 = scmp.eq.s32.totalorder %s14, 0
      %p76 = por %p74, %p75
      %p77 = scmp.ne.s32.totalorder %s69, %s71
      %p78 = scmp.eq.s32.totalorder %s19, 1
      %p79 = por %p77, %p78
      %p80 = scmp.ne.s32.totalorder %s71, %s72
      %p81 = scmp.eq.s32.totalorder %s19, 0
      %p82 = por %p80, %p81
      %p83 = scmp.ne.s32.totalorder %s71, %s72
      %p84 = scmp.eq.s32.totalorder %s20, 1
      %p85 = por %p83, %p84
      %p87 = scmp.ne.s32.totalorder %s72, %s86
      %p88 = scmp.eq.s32.totalorder %s20, 0
      %p89 = por %p87, %p88
      %s91 = sadd.s32 %s90, 1
      %p94 = scmp.eq.s32.totalorder %s14, 1
      %p95 = scmp.ne.s32.totalorder %s90, %s92
      %p96 = scmp.eq.s32.totalorder %s14, 0
      %p97 = por %p95, %p96
      %p98 = scmp.ne.s32.totalorder %s90, %s92
      %p99 = scmp.eq.s32.totalorder %s19, 1
      %p100 = por %p98, %p99
      %p101 = scmp.ne.s32.totalorder %s92, %s93
      %p102 = scmp.eq.s32.totalorder %s19, 0
      %p103 = por %p101, %p102
      %p104 = scmp.ne.s32.totalorder %s92, %s93
      %p105 = scmp.eq.s32.totalorder %s20, 1
      %p106 = por %p104, %p105
      %p108 = scmp.ne.s32.totalorder %s93, %s107
      %p109 = scmp.eq.s32.totalorder %s20, 0
      %p110 = por %p108, %p109
      %s112 = sadd.s32 %s111, 1
      %p115 = scmp.eq.s32.totalorder %s14, 1
      %p116 = scmp.ne.s32.totalorder %s111, %s113
      %p117 = scmp.eq.s32.totalorder %s14, 0
      %p118 = por %p116, %p117
      %p119 = scmp.ne.s32.totalorder %s111, %s113
      %p120 = scmp.eq.s32.totalorder %s19, 1
      %p121 = por %p119, %p120
      %p122 = scmp.ne.s32.totalorder %s113, %s114
      %p123 = scmp.eq.s32.totalorder %s19, 0
      %p124 = por %p122, %p123
      %p125 = scmp.ne.s32.totalorder %s113, %s114
      %p126 = scmp.eq.s32.totalorder %s20, 1
      %p127 = por %p125, %p126
      %p129 = scmp.ne.s32.totalorder %s114, %s128
      %p130 = scmp.eq.s32.totalorder %s20, 0
      %p131 = por %p129, %p130
      %s132 = ssub.s32 %s14, %s21
      %p133 = scmp.eq.s32.totalorder %s132, 0
      %s135 = sadd.s32 %s134, 1
      %s136 = scalar_select %p133, %s134, %s135
      %p139 = pneg %p133
      %p140 = scmp.eq.s32.totalorder %s14, 1
      %p141 = por %p139, %p140
      %p142 = scmp.ne.s32.totalorder %s134, %s137
      %p143 = scmp.eq.s32.totalorder %s14, 0
      %p144 = por %p142, %p143
      %p145 = scmp.ne.s32.totalorder %s134, %s137
      %p146 = scmp.eq.s32.totalorder %s19, 1
      %p147 = por %p145, %p146
      %p148 = scmp.ne.s32.totalorder %s137, %s138
      %p149 = scmp.eq.s32.totalorder %s19, 0
      %p150 = por %p148, %p149
      %p151 = scmp.ne.s32.totalorder %s137, %s138
      %p152 = scmp.eq.s32.totalorder %s20, 1
      %p153 = por %p151, %p152
      %p155 = scmp.ne.s32.totalorder %s138, %s154
      %p156 = scmp.eq.s32.totalorder %s20, 0
      %p157 = por %p155, %p156
      %p158 = scmp.le.s32.totalorder 1, %s14
      %p159 = scmp.lt.s32.totalorder %s14, 3
      %p160 = pnand %p158, %p159
      %p161 = pneg %p160
      // Predicated region
      $region9: #{region_based_pooling_forward.1} parent=5 // pred_check
        _
      $region10: #{region_based_pooling_forward.1} parent=5 // pred_check_branch
        %163 = sbr.rel (%p160) target = $region12
      $region11: #{region_based_pooling_forward.1} parent=5 // pred_region
        %s164 = ssub.s32 %s14, 1
        // Predicated region
        $region13: #{region_based_pooling_forward.1} parent=11 // pred_check
          %p165 = pneg %p61
        $region14: #{region_based_pooling_forward.1} parent=11 // pred_check_branch
          %167 = sbr.rel (%p165) target = $region16
        $region15: #{region_based_pooling_forward.1} parent=11 // pred_region
          %169 = vsyncadd [#allocation3], 0
          %s170 = sshll.u32 %s1, 4
          %s171 = int_to_ptr.hbm [resolvable:$true] %s170
          %s172 = sshll.u32 [#allocation2], 4
          %s173 = int_to_ptr.vmem [resolvable:$true] %s172
          %178 = dma.hbm_to_vmem [thread:$0]  %s171, 16384, %s173, [#allocation3], 1024, 1024, 64
        $region16: #{region_based_pooling_forward.1} parent=11 // pred_fallthru
          _
        // Predicated region
        $region17: #{region_based_pooling_forward.1} parent=11 // pred_check
          %p179 = pneg %p82
        $region18: #{region_based_pooling_forward.1} parent=11 // pred_check_branch
          %181 = sbr.rel (%p179) target = $region20
        $region19: #{region_based_pooling_forward.1} parent=11 // pred_region
          %183 = vsyncadd [#allocation4], 0
          %s185 = sshll.u32 %s2, 4
          %s186 = int_to_ptr.vmem [resolvable:$true] %s185
          %188 = dma.vmem_to_smem %s186, 16, [#allocation5], [#allocation4]
        $region20: #{region_based_pooling_forward.1} parent=11 // pred_fallthru
          _
        // Predicated region
        $region21: #{region_based_pooling_forward.1} parent=11 // pred_check
          %p189 = pneg %p103
        $region22: #{region_based_pooling_forward.1} parent=11 // pred_check_branch
          %191 = sbr.rel (%p189) target = $region24
        $region23: #{region_based_pooling_forward.1} parent=11 // pred_region
          %193 = vsyncadd [#allocation7], 0
          %s194 = sshll.u32 %s3, 4
          %s195 = int_to_ptr.hbm [resolvable:$true] %s194
          %s196 = sshll.u32 [#allocation6], 4
          %s197 = int_to_ptr.vmem [resolvable:$true] %s196
          %202 = dma.hbm_to_vmem [thread:$0]  %s195, 384, %s197, [#allocation7], 128, 128, 8
        $region24: #{region_based_pooling_forward.1} parent=11 // pred_fallthru
          _
        // Predicated region
        $region25: #{region_based_pooling_forward.1} parent=11 // pred_check
          %p203 = pneg %p124
        $region26: #{region_based_pooling_forward.1} parent=11 // pred_check_branch
          %205 = sbr.rel (%p203) target = $region28
        $region27: #{region_based_pooling_forward.1} parent=11 // pred_region
          _
        $region28: #{region_based_pooling_forward.1} parent=11 // pred_fallthru
          _
      $region12: #{region_based_pooling_forward.1} parent=5 // pred_fallthru
        _
      %p206 = scmp.lt.s32.totalorder %s14, 2
      // Predicated region
      $region29: #{region_based_pooling_forward.1} parent=5 // pred_check
        %p207 = pneg %p206
      $region30: #{region_based_pooling_forward.1} parent=5 // pred_check_branch
        %209 = sbr.rel (%p207) target = $region32
      $region31: #{region_based_pooling_forward.1} parent=5 // pred_region
        // Predicated region
        $region33: #{region_based_pooling_forward.1} parent=31 // pred_check
          %p210 = pneg %p34
        $region34: #{region_based_pooling_forward.1} parent=31 // pred_check_branch
          %212 = sbr.rel (%p210) target = $region36
        $region35: #{region_based_pooling_forward.1} parent=31 // pred_region
          %p213 = scmp.lt.s32.totalorder %s14, 1
          %s214 = scalar_select %p213, %s14, 1
          %s215 = smul.addr %s214, 2
          %s216 = smul.addr %s215, 8
          %s217 = scalar_lea.vmem %s0, %s216
        $region36: #{region_based_pooling_forward.1} parent=31 // pred_fallthru
          _
      $region32: #{region_based_pooling_forward.1} parent=5 // pred_fallthru
        _
      %p218 = scmp.le.s32.totalorder 1, %s14
      %p219 = scmp.lt.s32.totalorder %s14, 3
      %p220 = pnand %p218, %p219
      %p221 = pneg %p220
      // Predicated region
      $region37: #{region_based_pooling_forward.1} parent=5 // pred_check
        _
      $region38: #{region_based_pooling_forward.1} parent=5 // pred_check_branch
        %223 = sbr.rel (%p220) target = $region40
      $region39: #{region_based_pooling_forward.1} parent=5 // pred_region
        %s224 = ssub.s32 %s14, 1
        // Predicated region
        $region41: #{region_based_pooling_forward.1} parent=39 // pred_check
          %p225 = pneg %p61
        $region42: #{region_based_pooling_forward.1} parent=39 // pred_check_branch
          %227 = sbr.rel (%p225) target = $region44
        $region43: #{region_based_pooling_forward.1} parent=39 // pred_region
          %229 = dma.done [#allocation3], 16384
        $region44: #{region_based_pooling_forward.1} parent=39 // pred_fallthru
          _
        // Predicated region
        $region45: #{region_based_pooling_forward.1} parent=39 // pred_check
          %p230 = pneg %p82
        $region46: #{region_based_pooling_forward.1} parent=39 // pred_check_branch
          %232 = sbr.rel (%p230) target = $region48
        $region47: #{region_based_pooling_forward.1} parent=39 // pred_region
          %234 = dma.done [#allocation4], 16
        $region48: #{region_based_pooling_forward.1} parent=39 // pred_fallthru
          _
        // Predicated region
        $region49: #{region_based_pooling_forward.1} parent=39 // pred_check
          %p235 = pneg %p103
        $region50: #{region_based_pooling_forward.1} parent=39 // pred_check_branch
          %237 = sbr.rel (%p235) target = $region52
        $region51: #{region_based_pooling_forward.1} parent=39 // pred_region
          %239 = dma.done [#allocation7], 384
        $region52: #{region_based_pooling_forward.1} parent=39 // pred_fallthru
          _
        %240 = sfence
        %p241 = scmp.lt.s32.totalorder %s19, 1
        %s242 = scalar_select %p241, %s19, 1
        %s243 = smul.addr %s242, 2
        %s244 = smul.addr %s243, 8
        %s245 = scalar_lea.vmem %s0, %s244
        %p246 = pneg %p40
        %p247 = pneg %p37
        %p248 = pneg %p61
        %p249 = pneg %p58
        %p250 = pneg %p82
        %p251 = pneg %p79
        %p252 = pneg %p103
        %p253 = pneg %p100
        %p254 = pneg %p124
        %p255 = pneg %p121
        %p256 = pneg %p150
        %p257 = pneg %p147
        %p258 = scmp.lt.s32.totalorder %s19, 1
        %s259 = scalar_select %p258, %s19, 1
        %s260 = smul.addr %s259, 3
        %s261 = smul.addr %s260, 8
        %s262 = scalar_lea.vmem %s5, %s261
        %p263 = scmp.lt.s32.totalorder %s19, 1
        %s264 = scalar_select %p263, %s19, 1
        %s265 = smul.addr %s264, 2
        %s266 = smul.addr %s265, 8
        %s267 = scalar_lea.vmem %s0, %s266
        %p268 = scmp.lt.s32.totalorder %s19, 1
        %s269 = scalar_select %p268, %s19, 1
        %s270 = smul.addr %s269, 3
        %s271 = smul.addr %s270, 8
        %s272 = scalar_lea.vmem %s5, %s271
        %v273 = vld [vmem:[%s267] sm:$0xff]
        %v274 = vld [vmem:[%s267 + $0x8] sm:$0xff]
        %v275 = vpack.c.bf16 %v274, %v273
        %v276 = vld [vmem:[#allocation2] sm:$0xff]
        %v277 = vld [vmem:[#allocation2 + $0x8] sm:$0xff]
        %v278 = vld [vmem:[#allocation2 + $0x10] sm:$0xff]
        %v279 = vld [vmem:[#allocation2 + $0x18] sm:$0xff]
        %v280 = vld [vmem:[#allocation2 + $0x20] sm:$0xff]
        %v281 = vld [vmem:[#allocation2 + $0x28] sm:$0xff]
        %v282 = vld [vmem:[#allocation2 + $0x30] sm:$0xff]
        %v283 = vld [vmem:[#allocation2 + $0x38] sm:$0xff]
        %v284 = vld [vmem:[#allocation2 + $0x40] sm:$0xff]
        %v285 = vld [vmem:[#allocation2 + $0x48] sm:$0xff]
        %v286 = vld [vmem:[#allocation2 + $0x50] sm:$0xff]
        %v287 = vld [vmem:[#allocation2 + $0x58] sm:$0xff]
        %v288 = vld [vmem:[#allocation2 + $0x60] sm:$0xff]
        %v289 = vld [vmem:[#allocation2 + $0x68] sm:$0xff]
        %v290 = vld [vmem:[#allocation2 + $0x70] sm:$0xff]
        %v291 = vld [vmem:[#allocation2 + $0x78] sm:$0xff]
        %v292 = vld [vmem:[#allocation2 + $0x80] sm:$0xff]
        %v293 = vld [vmem:[#allocation2 + $0x88] sm:$0xff]
        %v294 = vld [vmem:[#allocation2 + $0x90] sm:$0xff]
        %v295 = vld [vmem:[#allocation2 + $0x98] sm:$0xff]
        %v296 = vld [vmem:[#allocation2 + $0xa0] sm:$0xff]
        %v297 = vld [vmem:[#allocation2 + $0xa8] sm:$0xff]
        %v298 = vld [vmem:[#allocation2 + $0xb0] sm:$0xff]
        %v299 = vld [vmem:[#allocation2 + $0xb8] sm:$0xff]
        %v300 = vld [vmem:[#allocation2 + $0xc0] sm:$0xff]
        %v301 = vld [vmem:[#allocation2 + $0xc8] sm:$0xff]
        %v302 = vld [vmem:[#allocation2 + $0xd0] sm:$0xff]
        %v303 = vld [vmem:[#allocation2 + $0xd8] sm:$0xff]
        %v304 = vld [vmem:[#allocation2 + $0xe0] sm:$0xff]
        %v305 = vld [vmem:[#allocation2 + $0xe8] sm:$0xff]
        %v306 = vld [vmem:[#allocation2 + $0xf0] sm:$0xff]
        %v307 = vld [vmem:[#allocation2 + $0xf8] sm:$0xff]
        %v308 = vld [vmem:[#allocation2 + $0x100] sm:$0xff]
        %v309 = vld [vmem:[#allocation2 + $0x108] sm:$0xff]
        %v310 = vld [vmem:[#allocation2 + $0x110] sm:$0xff]
        %v311 = vld [vmem:[#allocation2 + $0x118] sm:$0xff]
        %v312 = vld [vmem:[#allocation2 + $0x120] sm:$0xff]
        %v313 = vld [vmem:[#allocation2 + $0x128] sm:$0xff]
        %v314 = vld [vmem:[#allocation2 + $0x130] sm:$0xff]
        %v315 = vld [vmem:[#allocation2 + $0x138] sm:$0xff]
        %v316 = vld [vmem:[#allocation2 + $0x140] sm:$0xff]
        %v317 = vld [vmem:[#allocation2 + $0x148] sm:$0xff]
        %v318 = vld [vmem:[#allocation2 + $0x150] sm:$0xff]
        %v319 = vld [vmem:[#allocation2 + $0x158] sm:$0xff]
        %v320 = vld [vmem:[#allocation2 + $0x160] sm:$0xff]
        %v321 = vld [vmem:[#allocation2 + $0x168] sm:$0xff]
        %v322 = vld [vmem:[#allocation2 + $0x170] sm:$0xff]
        %v323 = vld [vmem:[#allocation2 + $0x178] sm:$0xff]
        %v324 = vld [vmem:[#allocation2 + $0x180] sm:$0xff]
        %v325 = vld [vmem:[#allocation2 + $0x188] sm:$0xff]
        %v326 = vld [vmem:[#allocation2 + $0x190] sm:$0xff]
        %v327 = vld [vmem:[#allocation2 + $0x198] sm:$0xff]
        %v328 = vld [vmem:[#allocation2 + $0x1a0] sm:$0xff]
        %v329 = vld [vmem:[#allocation2 + $0x1a8] sm:$0xff]
        %v330 = vld [vmem:[#allocation2 + $0x1b0] sm:$0xff]
        %v331 = vld [vmem:[#allocation2 + $0x1b8] sm:$0xff]
        %v332 = vld [vmem:[#allocation2 + $0x1c0] sm:$0xff]
        %v333 = vld [vmem:[#allocation2 + $0x1c8] sm:$0xff]
        %v334 = vld [vmem:[#allocation2 + $0x1d0] sm:$0xff]
        %v335 = vld [vmem:[#allocation2 + $0x1d8] sm:$0xff]
        %v336 = vld [vmem:[#allocation2 + $0x1e0] sm:$0xff]
        %v337 = vld [vmem:[#allocation2 + $0x1e8] sm:$0xff]
        %v338 = vld [vmem:[#allocation2 + $0x1f0] sm:$0xff]
        %v339 = vld [vmem:[#allocation2 + $0x1f8] sm:$0xff]
        %v340 = vld [vmem:[#allocation2 + $0x200] sm:$0xff]
        %v341 = vld [vmem:[#allocation2 + $0x208] sm:$0xff]
        %v342 = vld [vmem:[#allocation2 + $0x210] sm:$0xff]
        %v343 = vld [vmem:[#allocation2 + $0x218] sm:$0xff]
        %v344 = vld [vmem:[#allocation2 + $0x220] sm:$0xff]
        %v345 = vld [vmem:[#allocation2 + $0x228] sm:$0xff]
        %v346 = vld [vmem:[#allocation2 + $0x230] sm:$0xff]
        %v347 = vld [vmem:[#allocation2 + $0x238] sm:$0xff]
        %v348 = vld [vmem:[#allocation2 + $0x240] sm:$0xff]
        %v349 = vld [vmem:[#allocation2 + $0x248] sm:$0xff]
        %v350 = vld [vmem:[#allocation2 + $0x250] sm:$0xff]
        %v351 = vld [vmem:[#allocation2 + $0x258] sm:$0xff]
        %v352 = vld [vmem:[#allocation2 + $0x260] sm:$0xff]
        %v353 = vld [vmem:[#allocation2 + $0x268] sm:$0xff]
        %v354 = vld [vmem:[#allocation2 + $0x270] sm:$0xff]
        %v355 = vld [vmem:[#allocation2 + $0x278] sm:$0xff]
        %v356 = vld [vmem:[#allocation2 + $0x280] sm:$0xff]
        %v357 = vld [vmem:[#allocation2 + $0x288] sm:$0xff]
        %v358 = vld [vmem:[#allocation2 + $0x290] sm:$0xff]
        %v359 = vld [vmem:[#allocation2 + $0x298] sm:$0xff]
        %v360 = vld [vmem:[#allocation2 + $0x2a0] sm:$0xff]
        %v361 = vld [vmem:[#allocation2 + $0x2a8] sm:$0xff]
        %v362 = vld [vmem:[#allocation2 + $0x2b0] sm:$0xff]
        %v363 = vld [vmem:[#allocation2 + $0x2b8] sm:$0xff]
        %v364 = vld [vmem:[#allocation2 + $0x2c0] sm:$0xff]
        %v365 = vld [vmem:[#allocation2 + $0x2c8] sm:$0xff]
        %v366 = vld [vmem:[#allocation2 + $0x2d0] sm:$0xff]
        %v367 = vld [vmem:[#allocation2 + $0x2d8] sm:$0xff]
        %v368 = vld [vmem:[#allocation2 + $0x2e0] sm:$0xff]
        %v369 = vld [vmem:[#allocation2 + $0x2e8] sm:$0xff]
        %v370 = vld [vmem:[#allocation2 + $0x2f0] sm:$0xff]
        %v371 = vld [vmem:[#allocation2 + $0x2f8] sm:$0xff]
        %v372 = vld [vmem:[#allocation2 + $0x300] sm:$0xff]
        %v373 = vld [vmem:[#allocation2 + $0x308] sm:$0xff]
        %v374 = vld [vmem:[#allocation2 + $0x310] sm:$0xff]
        %v375 = vld [vmem:[#allocation2 + $0x318] sm:$0xff]
        %v376 = vld [vmem:[#allocation2 + $0x320] sm:$0xff]
        %v377 = vld [vmem:[#allocation2 + $0x328] sm:$0xff]
        %v378 = vld [vmem:[#allocation2 + $0x330] sm:$0xff]
        %v379 = vld [vmem:[#allocation2 + $0x338] sm:$0xff]
        %v380 = vld [vmem:[#allocation2 + $0x340] sm:$0xff]
        %v381 = vld [vmem:[#allocation2 + $0x348] sm:$0xff]
        %v382 = vld [vmem:[#allocation2 + $0x350] sm:$0xff]
        %v383 = vld [vmem:[#allocation2 + $0x358] sm:$0xff]
        %v384 = vld [vmem:[#allocation2 + $0x360] sm:$0xff]
        %v385 = vld [vmem:[#allocation2 + $0x368] sm:$0xff]
        %v386 = vld [vmem:[#allocation2 + $0x370] sm:$0xff]
        %v387 = vld [vmem:[#allocation2 + $0x378] sm:$0xff]
        %v388 = vld [vmem:[#allocation2 + $0x380] sm:$0xff]
        %v389 = vld [vmem:[#allocation2 + $0x388] sm:$0xff]
        %v390 = vld [vmem:[#allocation2 + $0x390] sm:$0xff]
        %v391 = vld [vmem:[#allocation2 + $0x398] sm:$0xff]
        %v392 = vld [vmem:[#allocation2 + $0x3a0] sm:$0xff]
        %v393 = vld [vmem:[#allocation2 + $0x3a8] sm:$0xff]
        %v394 = vld [vmem:[#allocation2 + $0x3b0] sm:$0xff]
        %v395 = vld [vmem:[#allocation2 + $0x3b8] sm:$0xff]
        %v396 = vld [vmem:[#allocation2 + $0x3c0] sm:$0xff]
        %v397 = vld [vmem:[#allocation2 + $0x3c8] sm:$0xff]
        %v398 = vld [vmem:[#allocation2 + $0x3d0] sm:$0xff]
        %v399 = vld [vmem:[#allocation2 + $0x3d8] sm:$0xff]
        %v400 = vld [vmem:[#allocation2 + $0x3e0] sm:$0xff]
        %v401 = vld [vmem:[#allocation2 + $0x3e8] sm:$0xff]
        %v402 = vld [vmem:[#allocation2 + $0x3f0] sm:$0xff]
        %v403 = vld [vmem:[#allocation2 + $0x3f8] sm:$0xff]
        %v532 = vunpack.c.l.b16 %v276
        %v533 = vunpack.c.h.b16 %v276
        %v534 = vunpack.c.l.b16 %v277
        %v535 = vunpack.c.h.b16 %v277
        %v536 = vunpack.c.l.b16 %v278
        %v537 = vunpack.c.h.b16 %v278
        %v538 = vunpack.c.l.b16 %v279
        %v539 = vunpack.c.h.b16 %v279
        %v540 = vunpack.c.l.b16 %v280
        %v541 = vunpack.c.h.b16 %v280
        %v542 = vunpack.c.l.b16 %v281
        %v543 = vunpack.c.h.b16 %v281
        %v544 = vunpack.c.l.b16 %v282
        %v545 = vunpack.c.h.b16 %v282
        %v546 = vunpack.c.l.b16 %v283
        %v547 = vunpack.c.h.b16 %v283
        %v548 = vunpack.c.l.b16 %v284
        %v549 = vunpack.c.h.b16 %v284
        %v550 = vunpack.c.l.b16 %v285
        %v551 = vunpack.c.h.b16 %v285
        %v552 = vunpack.c.l.b16 %v286
        %v553 = vunpack.c.h.b16 %v286
        %v554 = vunpack.c.l.b16 %v287
        %v555 = vunpack.c.h.b16 %v287
        %v556 = vunpack.c.l.b16 %v288
        %v557 = vunpack.c.h.b16 %v288
        %v558 = vunpack.c.l.b16 %v289
        %v559 = vunpack.c.h.b16 %v289
        %v560 = vunpack.c.l.b16 %v290
        %v561 = vunpack.c.h.b16 %v290
        %v562 = vunpack.c.l.b16 %v291
        %v563 = vunpack.c.h.b16 %v291
        %v564 = vunpack.c.l.b16 %v292
        %v565 = vunpack.c.h.b16 %v292
        %v566 = vunpack.c.l.b16 %v293
        %v567 = vunpack.c.h.b16 %v293
        %v568 = vunpack.c.l.b16 %v294
        %v569 = vunpack.c.h.b16 %v294
        %v570 = vunpack.c.l.b16 %v295
        %v571 = vunpack.c.h.b16 %v295
        %v572 = vunpack.c.l.b16 %v296
        %v573 = vunpack.c.h.b16 %v296
        %v574 = vunpack.c.l.b16 %v297
        %v575 = vunpack.c.h.b16 %v297
        %v576 = vunpack.c.l.b16 %v298
        %v577 = vunpack.c.h.b16 %v298
        %v578 = vunpack.c.l.b16 %v299
        %v579 = vunpack.c.h.b16 %v299
        %v580 = vunpack.c.l.b16 %v300
        %v581 = vunpack.c.h.b16 %v300
        %v582 = vunpack.c.l.b16 %v301
        %v583 = vunpack.c.h.b16 %v301
        %v584 = vunpack.c.l.b16 %v302
        %v585 = vunpack.c.h.b16 %v302
        %v586 = vunpack.c.l.b16 %v303
        %v587 = vunpack.c.h.b16 %v303
        %v588 = vunpack.c.l.b16 %v304
        %v589 = vunpack.c.h.b16 %v304
        %v590 = vunpack.c.l.b16 %v305
        %v591 = vunpack.c.h.b16 %v305
        %v592 = vunpack.c.l.b16 %v306
        %v593 = vunpack.c.h.b16 %v306
        %v594 = vunpack.c.l.b16 %v307
        %v595 = vunpack.c.h.b16 %v307
        %v596 = vunpack.c.l.b16 %v308
        %v597 = vunpack.c.h.b16 %v308
        %v598 = vunpack.c.l.b16 %v309
        %v599 = vunpack.c.h.b16 %v309
        %v600 = vunpack.c.l.b16 %v310
        %v601 = vunpack.c.h.b16 %v310
        %v602 = vunpack.c.l.b16 %v311
        %v603 = vunpack.c.h.b16 %v311
        %v604 = vunpack.c.l.b16 %v312
        %v605 = vunpack.c.h.b16 %v312
        %v606 = vunpack.c.l.b16 %v313
        %v607 = vunpack.c.h.b16 %v313
        %v608 = vunpack.c.l.b16 %v314
        %v609 = vunpack.c.h.b16 %v314
        %v610 = vunpack.c.l.b16 %v315
        %v611 = vunpack.c.h.b16 %v315
        %v612 = vunpack.c.l.b16 %v316
        %v613 = vunpack.c.h.b16 %v316
        %v614 = vunpack.c.l.b16 %v317
        %v615 = vunpack.c.h.b16 %v317
        %v616 = vunpack.c.l.b16 %v318
        %v617 = vunpack.c.h.b16 %v318
        %v618 = vunpack.c.l.b16 %v319
        %v619 = vunpack.c.h.b16 %v319
        %v620 = vunpack.c.l.b16 %v320
        %v621 = vunpack.c.h.b16 %v320
        %v622 = vunpack.c.l.b16 %v321
        %v623 = vunpack.c.h.b16 %v321
        %v624 = vunpack.c.l.b16 %v322
        %v625 = vunpack.c.h.b16 %v322
        %v626 = vunpack.c.l.b16 %v323
        %v627 = vunpack.c.h.b16 %v323
        %v628 = vunpack.c.l.b16 %v324
        %v629 = vunpack.c.h.b16 %v324
        %v630 = vunpack.c.l.b16 %v325
        %v631 = vunpack.c.h.b16 %v325
        %v632 = vunpack.c.l.b16 %v326
        %v633 = vunpack.c.h.b16 %v326
        %v634 = vunpack.c.l.b16 %v327
        %v635 = vunpack.c.h.b16 %v327
        %v636 = vunpack.c.l.b16 %v328
        %v637 = vunpack.c.h.b16 %v328
        %v638 = vunpack.c.l.b16 %v329
        %v639 = vunpack.c.h.b16 %v329
        %v640 = vunpack.c.l.b16 %v330
        %v641 = vunpack.c.h.b16 %v330
        %v642 = vunpack.c.l.b16 %v331
        %v643 = vunpack.c.h.b16 %v331
        %v644 = vunpack.c.l.b16 %v332
        %v645 = vunpack.c.h.b16 %v332
        %v646 = vunpack.c.l.b16 %v333
        %v647 = vunpack.c.h.b16 %v333
        %v648 = vunpack.c.l.b16 %v334
        %v649 = vunpack.c.h.b16 %v334
        %v650 = vunpack.c.l.b16 %v335
        %v651 = vunpack.c.h.b16 %v335
        %v652 = vunpack.c.l.b16 %v336
        %v653 = vunpack.c.h.b16 %v336
        %v654 = vunpack.c.l.b16 %v337
        %v655 = vunpack.c.h.b16 %v337
        %v656 = vunpack.c.l.b16 %v338
        %v657 = vunpack.c.h.b16 %v338
        %v658 = vunpack.c.l.b16 %v339
        %v659 = vunpack.c.h.b16 %v339
        %v660 = vunpack.c.l.b16 %v340
        %v661 = vunpack.c.h.b16 %v340
        %v662 = vunpack.c.l.b16 %v341
        %v663 = vunpack.c.h.b16 %v341
        %v664 = vunpack.c.l.b16 %v342
        %v665 = vunpack.c.h.b16 %v342
        %v666 = vunpack.c.l.b16 %v343
        %v667 = vunpack.c.h.b16 %v343
        %v668 = vunpack.c.l.b16 %v344
        %v669 = vunpack.c.h.b16 %v344
        %v670 = vunpack.c.l.b16 %v345
        %v671 = vunpack.c.h.b16 %v345
        %v672 = vunpack.c.l.b16 %v346
        %v673 = vunpack.c.h.b16 %v346
        %v674 = vunpack.c.l.b16 %v347
        %v675 = vunpack.c.h.b16 %v347
        %v676 = vunpack.c.l.b16 %v348
        %v677 = vunpack.c.h.b16 %v348
        %v678 = vunpack.c.l.b16 %v349
        %v679 = vunpack.c.h.b16 %v349
        %v680 = vunpack.c.l.b16 %v350
        %v681 = vunpack.c.h.b16 %v350
        %v682 = vunpack.c.l.b16 %v351
        %v683 = vunpack.c.h.b16 %v351
        %v684 = vunpack.c.l.b16 %v352
        %v685 = vunpack.c.h.b16 %v352
        %v686 = vunpack.c.l.b16 %v353
        %v687 = vunpack.c.h.b16 %v353
        %v688 = vunpack.c.l.b16 %v354
        %v689 = vunpack.c.h.b16 %v354
        %v690 = vunpack.c.l.b16 %v355
        %v691 = vunpack.c.h.b16 %v355
        %v692 = vunpack.c.l.b16 %v356
        %v693 = vunpack.c.h.b16 %v356
        %v694 = vunpack.c.l.b16 %v357
        %v695 = vunpack.c.h.b16 %v357
        %v696 = vunpack.c.l.b16 %v358
        %v697 = vunpack.c.h.b16 %v358
        %v698 = vunpack.c.l.b16 %v359
        %v699 = vunpack.c.h.b16 %v359
        %v700 = vunpack.c.l.b16 %v360
        %v701 = vunpack.c.h.b16 %v360
        %v702 = vunpack.c.l.b16 %v361
        %v703 = vunpack.c.h.b16 %v361
        %v704 = vunpack.c.l.b16 %v362
        %v705 = vunpack.c.h.b16 %v362
        %v706 = vunpack.c.l.b16 %v363
        %v707 = vunpack.c.h.b16 %v363
        %v708 = vunpack.c.l.b16 %v364
        %v709 = vunpack.c.h.b16 %v364
        %v710 = vunpack.c.l.b16 %v365
        %v711 = vunpack.c.h.b16 %v365
        %v712 = vunpack.c.l.b16 %v366
        %v713 = vunpack.c.h.b16 %v366
        %v714 = vunpack.c.l.b16 %v367
        %v715 = vunpack.c.h.b16 %v367
        %v716 = vunpack.c.l.b16 %v368
        %v717 = vunpack.c.h.b16 %v368
        %v718 = vunpack.c.l.b16 %v369
        %v719 = vunpack.c.h.b16 %v369
        %v720 = vunpack.c.l.b16 %v370
        %v721 = vunpack.c.h.b16 %v370
        %v722 = vunpack.c.l.b16 %v371
        %v723 = vunpack.c.h.b16 %v371
        %v724 = vunpack.c.l.b16 %v372
        %v725 = vunpack.c.h.b16 %v372
        %v726 = vunpack.c.l.b16 %v373
        %v727 = vunpack.c.h.b16 %v373
        %v728 = vunpack.c.l.b16 %v374
        %v729 = vunpack.c.h.b16 %v374
        %v730 = vunpack.c.l.b16 %v375
        %v731 = vunpack.c.h.b16 %v375
        %v732 = vunpack.c.l.b16 %v376
        %v733 = vunpack.c.h.b16 %v376
        %v734 = vunpack.c.l.b16 %v377
        %v735 = vunpack.c.h.b16 %v377
        %v736 = vunpack.c.l.b16 %v378
        %v737 = vunpack.c.h.b16 %v378
        %v738 = vunpack.c.l.b16 %v379
        %v739 = vunpack.c.h.b16 %v379
        %v740 = vunpack.c.l.b16 %v380
        %v741 = vunpack.c.h.b16 %v380
        %v742 = vunpack.c.l.b16 %v381
        %v743 = vunpack.c.h.b16 %v381
        %v744 = vunpack.c.l.b16 %v382
        %v745 = vunpack.c.h.b16 %v382
        %v746 = vunpack.c.l.b16 %v383
        %v747 = vunpack.c.h.b16 %v383
        %v748 = vunpack.c.l.b16 %v384
        %v749 = vunpack.c.h.b16 %v384
        %v750 = vunpack.c.l.b16 %v385
        %v751 = vunpack.c.h.b16 %v385
        %v752 = vunpack.c.l.b16 %v386
        %v753 = vunpack.c.h.b16 %v386
        %v754 = vunpack.c.l.b16 %v387
        %v755 = vunpack.c.h.b16 %v387
        %v756 = vunpack.c.l.b16 %v388
        %v757 = vunpack.c.h.b16 %v388
        %v758 = vunpack.c.l.b16 %v389
        %v759 = vunpack.c.h.b16 %v389
        %v760 = vunpack.c.l.b16 %v390
        %v761 = vunpack.c.h.b16 %v390
        %v762 = vunpack.c.l.b16 %v391
        %v763 = vunpack.c.h.b16 %v391
        %v764 = vunpack.c.l.b16 %v392
        %v765 = vunpack.c.h.b16 %v392
        %v766 = vunpack.c.l.b16 %v393
        %v767 = vunpack.c.h.b16 %v393
        %v768 = vunpack.c.l.b16 %v394
        %v769 = vunpack.c.h.b16 %v394
        %v770 = vunpack.c.l.b16 %v395
        %v771 = vunpack.c.h.b16 %v395
        %v772 = vunpack.c.l.b16 %v396
        %v773 = vunpack.c.h.b16 %v396
        %v774 = vunpack.c.l.b16 %v397
        %v775 = vunpack.c.h.b16 %v397
        %v776 = vunpack.c.l.b16 %v398
        %v777 = vunpack.c.h.b16 %v398
        %v778 = vunpack.c.l.b16 %v399
        %v779 = vunpack.c.h.b16 %v399
        %v780 = vunpack.c.l.b16 %v400
        %v781 = vunpack.c.h.b16 %v400
        %v782 = vunpack.c.l.b16 %v401
        %v783 = vunpack.c.h.b16 %v401
        %v784 = vunpack.c.l.b16 %v402
        %v785 = vunpack.c.h.b16 %v402
        %v786 = vunpack.c.l.b16 %v403
        %v787 = vunpack.c.h.b16 %v403
        %v788 = vpack.c.b16 %v548, %v532
        %v789 = vpack.c.b16 %v549, %v533
        %v790 = vpack.c.b16 %v550, %v534
        %v791 = vpack.c.b16 %v551, %v535
        %v792 = vpack.c.b16 %v552, %v536
        %v793 = vpack.c.b16 %v553, %v537
        %v794 = vpack.c.b16 %v554, %v538
        %v795 = vpack.c.b16 %v555, %v539
        %v796 = vpack.c.b16 %v556, %v540
        %v797 = vpack.c.b16 %v557, %v541
        %v798 = vpack.c.b16 %v558, %v542
        %v799 = vpack.c.b16 %v559, %v543
        %v800 = vpack.c.b16 %v560, %v544
        %v801 = vpack.c.b16 %v561, %v545
        %v802 = vpack.c.b16 %v562, %v546
        %v803 = vpack.c.b16 %v563, %v547
        %v804 = vpack.c.b16 %v580, %v564
        %v805 = vpack.c.b16 %v581, %v565
        %v806 = vpack.c.b16 %v582, %v566
        %v807 = vpack.c.b16 %v583, %v567
        %v808 = vpack.c.b16 %v584, %v568
        %v809 = vpack.c.b16 %v585, %v569
        %v810 = vpack.c.b16 %v586, %v570
        %v811 = vpack.c.b16 %v587, %v571
        %v812 = vpack.c.b16 %v588, %v572
        %v813 = vpack.c.b16 %v589, %v573
        %v814 = vpack.c.b16 %v590, %v574
        %v815 = vpack.c.b16 %v591, %v575
        %v816 = vpack.c.b16 %v592, %v576
        %v817 = vpack.c.b16 %v593, %v577
        %v818 = vpack.c.b16 %v594, %v578
        %v819 = vpack.c.b16 %v595, %v579
        %v820 = vpack.c.b16 %v612, %v596
        %v821 = vpack.c.b16 %v613, %v597
        %v822 = vpack.c.b16 %v614, %v598
        %v823 = vpack.c.b16 %v615, %v599
        %v824 = vpack.c.b16 %v616, %v600
        %v825 = vpack.c.b16 %v617, %v601
        %v826 = vpack.c.b16 %v618, %v602
        %v827 = vpack.c.b16 %v619, %v603
        %v828 = vpack.c.b16 %v620, %v604
        %v829 = vpack.c.b16 %v621, %v605
        %v830 = vpack.c.b16 %v622, %v606
        %v831 = vpack.c.b16 %v623, %v607
        %v832 = vpack.c.b16 %v624, %v608
        %v833 = vpack.c.b16 %v625, %v609
        %v834 = vpack.c.b16 %v626, %v610
        %v835 = vpack.c.b16 %v627, %v611
        %v836 = vpack.c.b16 %v644, %v628
        %v837 = vpack.c.b16 %v645, %v629
        %v838 = vpack.c.b16 %v646, %v630
        %v839 = vpack.c.b16 %v647, %v631
        %v840 = vpack.c.b16 %v648, %v632
        %v841 = vpack.c.b16 %v649, %v633
        %v842 = vpack.c.b16 %v650, %v634
        %v843 = vpack.c.b16 %v651, %v635
        %v844 = vpack.c.b16 %v652, %v636
        %v845 = vpack.c.b16 %v653, %v637
        %v846 = vpack.c.b16 %v654, %v638
        %v847 = vpack.c.b16 %v655, %v639
        %v848 = vpack.c.b16 %v656, %v640
        %v849 = vpack.c.b16 %v657, %v641
        %v850 = vpack.c.b16 %v658, %v642
        %v851 = vpack.c.b16 %v659, %v643
        %v852 = vpack.c.b16 %v676, %v660
        %v853 = vpack.c.b16 %v677, %v661
        %v854 = vpack.c.b16 %v678, %v662
        %v855 = vpack.c.b16 %v679, %v663
        %v856 = vpack.c.b16 %v680, %v664
        %v857 = vpack.c.b16 %v681, %v665
        %v858 = vpack.c.b16 %v682, %v666
        %v859 = vpack.c.b16 %v683, %v667
        %v860 = vpack.c.b16 %v684, %v668
        %v861 = vpack.c.b16 %v685, %v669
        %v862 = vpack.c.b16 %v686, %v670
        %v863 = vpack.c.b16 %v687, %v671
        %v864 = vpack.c.b16 %v688, %v672
        %v865 = vpack.c.b16 %v689, %v673
        %v866 = vpack.c.b16 %v690, %v674
        %v867 = vpack.c.b16 %v691, %v675
        %v868 = vpack.c.b16 %v708, %v692
        %v869 = vpack.c.b16 %v709, %v693
        %v870 = vpack.c.b16 %v710, %v694
        %v871 = vpack.c.b16 %v711, %v695
        %v872 = vpack.c.b16 %v712, %v696
        %v873 = vpack.c.b16 %v713, %v697
        %v874 = vpack.c.b16 %v714, %v698
        %v875 = vpack.c.b16 %v715, %v699
        %v876 = vpack.c.b16 %v716, %v700
        %v877 = vpack.c.b16 %v717, %v701
        %v878 = vpack.c.b16 %v718, %v702
        %v879 = vpack.c.b16 %v719, %v703
        %v880 = vpack.c.b16 %v720, %v704
        %v881 = vpack.c.b16 %v721, %v705
        %v882 = vpack.c.b16 %v722, %v706
        %v883 = vpack.c.b16 %v723, %v707
        %v884 = vpack.c.b16 %v740, %v724
        %v885 = vpack.c.b16 %v741, %v725
        %v886 = vpack.c.b16 %v742, %v726
        %v887 = vpack.c.b16 %v743, %v727
        %v888 = vpack.c.b16 %v744, %v728
        %v889 = vpack.c.b16 %v745, %v729
        %v890 = vpack.c.b16 %v746, %v730
        %v891 = vpack.c.b16 %v747, %v731
        %v892 = vpack.c.b16 %v748, %v732
        %v893 = vpack.c.b16 %v749, %v733
        %v894 = vpack.c.b16 %v750, %v734
        %v895 = vpack.c.b16 %v751, %v735
        %v896 = vpack.c.b16 %v752, %v736
        %v897 = vpack.c.b16 %v753, %v737
        %v898 = vpack.c.b16 %v754, %v738
        %v899 = vpack.c.b16 %v755, %v739
        %v900 = vpack.c.b16 %v772, %v756
        %v901 = vpack.c.b16 %v773, %v757
        %v902 = vpack.c.b16 %v774, %v758
        %v903 = vpack.c.b16 %v775, %v759
        %v904 = vpack.c.b16 %v776, %v760
        %v905 = vpack.c.b16 %v777, %v761
        %v906 = vpack.c.b16 %v778, %v762
        %v907 = vpack.c.b16 %v779, %v763
        %v908 = vpack.c.b16 %v780, %v764
        %v909 = vpack.c.b16 %v781, %v765
        %v910 = vpack.c.b16 %v782, %v766
        %v911 = vpack.c.b16 %v783, %v767
        %v912 = vpack.c.b16 %v784, %v768
        %v913 = vpack.c.b16 %v785, %v769
        %v914 = vpack.c.b16 %v786, %v770
        %v915 = vpack.c.b16 %v787, %v771
        %1044 = vmatpush.bf16.msra.mxu0 %v900
        %1045 = vmatpush.bf16.msra.mxu0 %v884
        %1046 = vmatpush.bf16.msra.mxu0 %v868
        %1047 = vmatpush.bf16.msra.mxu0 %v852
        %1048 = vmatpush.bf16.msra.mxu0 %v836
        %1049 = vmatpush.bf16.msra.mxu0 %v820
        %1050 = vmatpush.bf16.msra.mxu0 %v804
        %1051 = vmatpush.bf16.msra.mxu0 %v788
        %1052 = vmatmul.bf16.gmra.mxu0 %v275
        %v1053 = vpop.f32.mrf.mxu0
        %v1054 = vadd.f32 0.0, %v1053
        %v1055 = vpop.f32.mrf.mxu0
        %v1056 = vadd.f32 0.0, %v1055
        %1057 = vdwg.mxu0
        %1058 = vmatpush.bf16.msra.mxu0 %v901
        %1059 = vmatpush.bf16.msra.mxu0 %v885
        %1060 = vmatpush.bf16.msra.mxu0 %v869
        %1061 = vmatpush.bf16.msra.mxu0 %v853
        %1062 = vmatpush.bf16.msra.mxu0 %v837
        %1063 = vmatpush.bf16.msra.mxu0 %v821
        %1064 = vmatpush.bf16.msra.mxu0 %v805
        %1065 = vmatpush.bf16.msra.mxu0 %v789
        %1066 = vmatmul.bf16.gmra.mxu0 %v275
        %v1067 = vpop.f32.mrf.mxu0
        %v1068 = vadd.f32 0.0, %v1067
        %v1069 = vpop.f32.mrf.mxu0
        %v1070 = vadd.f32 0.0, %v1069
        %1071 = vdwg.mxu0
        %1072 = vmatpush.bf16.msra.mxu0 %v902
        %1073 = vmatpush.bf16.msra.mxu0 %v886
        %1074 = vmatpush.bf16.msra.mxu0 %v870
        %1075 = vmatpush.bf16.msra.mxu0 %v854
        %1076 = vmatpush.bf16.msra.mxu0 %v838
        %1077 = vmatpush.bf16.msra.mxu0 %v822
        %1078 = vmatpush.bf16.msra.mxu0 %v806
        %1079 = vmatpush.bf16.msra.mxu0 %v790
        %1080 = vmatmul.bf16.gmra.mxu0 %v275
        %v1081 = vpop.f32.mrf.mxu0
        %v1082 = vadd.f32 0.0, %v1081
        %v1083 = vpop.f32.mrf.mxu0
        %v1084 = vadd.f32 0.0, %v1083
        %1085 = vdwg.mxu0
        %1086 = vmatpush.bf16.msra.mxu0 %v903
        %1087 = vmatpush.bf16.msra.mxu0 %v887
        %1088 = vmatpush.bf16.msra.mxu0 %v871
        %1089 = vmatpush.bf16.msra.mxu0 %v855
        %1090 = vmatpush.bf16.msra.mxu0 %v839
        %1091 = vmatpush.bf16.msra.mxu0 %v823
        %1092 = vmatpush.bf16.msra.mxu0 %v807
        %1093 = vmatpush.bf16.msra.mxu0 %v791
        %1094 = vmatmul.bf16.gmra.mxu0 %v275
        %v1095 = vpop.f32.mrf.mxu0
        %v1096 = vadd.f32 0.0, %v1095
        %v1097 = vpop.f32.mrf.mxu0
        %v1098 = vadd.f32 0.0, %v1097
        %1099 = vdwg.mxu0
        %1100 = vmatpush.bf16.msra.mxu0 %v904
        %1101 = vmatpush.bf16.msra.mxu0 %v888
        %1102 = vmatpush.bf16.msra.mxu0 %v872
        %1103 = vmatpush.bf16.msra.mxu0 %v856
        %1104 = vmatpush.bf16.msra.mxu0 %v840
        %1105 = vmatpush.bf16.msra.mxu0 %v824
        %1106 = vmatpush.bf16.msra.mxu0 %v808
        %1107 = vmatpush.bf16.msra.mxu0 %v792
        %1108 = vmatmul.bf16.gmra.mxu0 %v275
        %v1109 = vpop.f32.mrf.mxu0
        %v1110 = vadd.f32 0.0, %v1109
        %v1111 = vpop.f32.mrf.mxu0
        %v1112 = vadd.f32 0.0, %v1111
        %1113 = vdwg.mxu0
        %1114 = vmatpush.bf16.msra.mxu0 %v905
        %1115 = vmatpush.bf16.msra.mxu0 %v889
        %1116 = vmatpush.bf16.msra.mxu0 %v873
        %1117 = vmatpush.bf16.msra.mxu0 %v857
        %1118 = vmatpush.bf16.msra.mxu0 %v841
        %1119 = vmatpush.bf16.msra.mxu0 %v825
        %1120 = vmatpush.bf16.msra.mxu0 %v809
        %1121 = vmatpush.bf16.msra.mxu0 %v793
        %1122 = vmatmul.bf16.gmra.mxu0 %v275
        %v1123 = vpop.f32.mrf.mxu0
        %v1124 = vadd.f32 0.0, %v1123
        %v1125 = vpop.f32.mrf.mxu0
        %v1126 = vadd.f32 0.0, %v1125
        %1127 = vdwg.mxu0
        %1128 = vmatpush.bf16.msra.mxu0 %v906
        %1129 = vmatpush.bf16.msra.mxu0 %v890
        %1130 = vmatpush.bf16.msra.mxu0 %v874
        %1131 = vmatpush.bf16.msra.mxu0 %v858
        %1132 = vmatpush.bf16.msra.mxu0 %v842
        %1133 = vmatpush.bf16.msra.mxu0 %v826
        %1134 = vmatpush.bf16.msra.mxu0 %v810
        %1135 = vmatpush.bf16.msra.mxu0 %v794
        %1136 = vmatmul.bf16.gmra.mxu0 %v275
        %v1137 = vpop.f32.mrf.mxu0
        %v1138 = vadd.f32 0.0, %v1137
        %v1139 = vpop.f32.mrf.mxu0
        %v1140 = vadd.f32 0.0, %v1139
        %1141 = vdwg.mxu0
        %1142 = vmatpush.bf16.msra.mxu0 %v907
        %1143 = vmatpush.bf16.msra.mxu0 %v891
        %1144 = vmatpush.bf16.msra.mxu0 %v875
        %1145 = vmatpush.bf16.msra.mxu0 %v859
        %1146 = vmatpush.bf16.msra.mxu0 %v843
        %1147 = vmatpush.bf16.msra.mxu0 %v827
        %1148 = vmatpush.bf16.msra.mxu0 %v811
        %1149 = vmatpush.bf16.msra.mxu0 %v795
        %1150 = vmatmul.bf16.gmra.mxu0 %v275
        %v1151 = vpop.f32.mrf.mxu0
        %v1152 = vadd.f32 0.0, %v1151
        %v1153 = vpop.f32.mrf.mxu0
        %v1154 = vadd.f32 0.0, %v1153
        %1155 = vdwg.mxu0
        %1156 = vmatpush.bf16.msra.mxu0 %v908
        %1157 = vmatpush.bf16.msra.mxu0 %v892
        %1158 = vmatpush.bf16.msra.mxu0 %v876
        %1159 = vmatpush.bf16.msra.mxu0 %v860
        %1160 = vmatpush.bf16.msra.mxu0 %v844
        %1161 = vmatpush.bf16.msra.mxu0 %v828
        %1162 = vmatpush.bf16.msra.mxu0 %v812
        %1163 = vmatpush.bf16.msra.mxu0 %v796
        %1164 = vmatmul.bf16.gmra.mxu0 %v275
        %v1165 = vpop.f32.mrf.mxu0
        %v1166 = vadd.f32 0.0, %v1165
        %v1167 = vpop.f32.mrf.mxu0
        %v1168 = vadd.f32 0.0, %v1167
        %1169 = vdwg.mxu0
        %1170 = vmatpush.bf16.msra.mxu0 %v909
        %1171 = vmatpush.bf16.msra.mxu0 %v893
        %1172 = vmatpush.bf16.msra.mxu0 %v877
        %1173 = vmatpush.bf16.msra.mxu0 %v861
        %1174 = vmatpush.bf16.msra.mxu0 %v845
        %1175 = vmatpush.bf16.msra.mxu0 %v829
        %1176 = vmatpush.bf16.msra.mxu0 %v813
        %1177 = vmatpush.bf16.msra.mxu0 %v797
        %1178 = vmatmul.bf16.gmra.mxu0 %v275
        %v1179 = vpop.f32.mrf.mxu0
        %v1180 = vadd.f32 0.0, %v1179
        %v1181 = vpop.f32.mrf.mxu0
        %v1182 = vadd.f32 0.0, %v1181
        %1183 = vdwg.mxu0
        %1184 = vmatpush.bf16.msra.mxu0 %v910
        %1185 = vmatpush.bf16.msra.mxu0 %v894
        %1186 = vmatpush.bf16.msra.mxu0 %v878
        %1187 = vmatpush.bf16.msra.mxu0 %v862
        %1188 = vmatpush.bf16.msra.mxu0 %v846
        %1189 = vmatpush.bf16.msra.mxu0 %v830
        %1190 = vmatpush.bf16.msra.mxu0 %v814
        %1191 = vmatpush.bf16.msra.mxu0 %v798
        %1192 = vmatmul.bf16.gmra.mxu0 %v275
        %v1193 = vpop.f32.mrf.mxu0
        %v1194 = vadd.f32 0.0, %v1193
        %v1195 = vpop.f32.mrf.mxu0
        %v1196 = vadd.f32 0.0, %v1195
        %1197 = vdwg.mxu0
        %1198 = vmatpush.bf16.msra.mxu0 %v911
        %1199 = vmatpush.bf16.msra.mxu0 %v895
        %1200 = vmatpush.bf16.msra.mxu0 %v879
        %1201 = vmatpush.bf16.msra.mxu0 %v863
        %1202 = vmatpush.bf16.msra.mxu0 %v847
        %1203 = vmatpush.bf16.msra.mxu0 %v831
        %1204 = vmatpush.bf16.msra.mxu0 %v815
        %1205 = vmatpush.bf16.msra.mxu0 %v799
        %1206 = vmatmul.bf16.gmra.mxu0 %v275
        %v1207 = vpop.f32.mrf.mxu0
        %v1208 = vadd.f32 0.0, %v1207
        %v1209 = vpop.f32.mrf.mxu0
        %v1210 = vadd.f32 0.0, %v1209
        %1211 = vdwg.mxu0
        %1212 = vmatpush.bf16.msra.mxu0 %v912
        %1213 = vmatpush.bf16.msra.mxu0 %v896
        %1214 = vmatpush.bf16.msra.mxu0 %v880
        %1215 = vmatpush.bf16.msra.mxu0 %v864
        %1216 = vmatpush.bf16.msra.mxu0 %v848
        %1217 = vmatpush.bf16.msra.mxu0 %v832
        %1218 = vmatpush.bf16.msra.mxu0 %v816
        %1219 = vmatpush.bf16.msra.mxu0 %v800
        %1220 = vmatmul.bf16.gmra.mxu0 %v275
        %v1221 = vpop.f32.mrf.mxu0
        %v1222 = vadd.f32 0.0, %v1221
        %v1223 = vpop.f32.mrf.mxu0
        %v1224 = vadd.f32 0.0, %v1223
        %1225 = vdwg.mxu0
        %1226 = vmatpush.bf16.msra.mxu0 %v913
        %1227 = vmatpush.bf16.msra.mxu0 %v897
        %1228 = vmatpush.bf16.msra.mxu0 %v881
        %1229 = vmatpush.bf16.msra.mxu0 %v865
        %1230 = vmatpush.bf16.msra.mxu0 %v849
        %1231 = vmatpush.bf16.msra.mxu0 %v833
        %1232 = vmatpush.bf16.msra.mxu0 %v817
        %1233 = vmatpush.bf16.msra.mxu0 %v801
        %1234 = vmatmul.bf16.gmra.mxu0 %v275
        %v1235 = vpop.f32.mrf.mxu0
        %v1236 = vadd.f32 0.0, %v1235
        %v1237 = vpop.f32.mrf.mxu0
        %v1238 = vadd.f32 0.0, %v1237
        %1239 = vdwg.mxu0
        %1240 = vmatpush.bf16.msra.mxu0 %v914
        %1241 = vmatpush.bf16.msra.mxu0 %v898
        %1242 = vmatpush.bf16.msra.mxu0 %v882
        %1243 = vmatpush.bf16.msra.mxu0 %v866
        %1244 = vmatpush.bf16.msra.mxu0 %v850
        %1245 = vmatpush.bf16.msra.mxu0 %v834
        %1246 = vmatpush.bf16.msra.mxu0 %v818
        %1247 = vmatpush.bf16.msra.mxu0 %v802
        %1248 = vmatmul.bf16.gmra.mxu0 %v275
        %v1249 = vpop.f32.mrf.mxu0
        %v1250 = vadd.f32 0.0, %v1249
        %v1251 = vpop.f32.mrf.mxu0
        %v1252 = vadd.f32 0.0, %v1251
        %1253 = vdwg.mxu0
        %1254 = vmatpush.bf16.msra.mxu0 %v915
        %1255 = vmatpush.bf16.msra.mxu0 %v899
        %1256 = vmatpush.bf16.msra.mxu0 %v883
        %1257 = vmatpush.bf16.msra.mxu0 %v867
        %1258 = vmatpush.bf16.msra.mxu0 %v851
        %1259 = vmatpush.bf16.msra.mxu0 %v835
        %1260 = vmatpush.bf16.msra.mxu0 %v819
        %1261 = vmatpush.bf16.msra.mxu0 %v803
        %1262 = vmatmul.bf16.gmra.mxu0 %v275
        %v1263 = vpop.f32.mrf.mxu0
        %v1264 = vadd.f32 0.0, %v1263
        %v1265 = vpop.f32.mrf.mxu0
        %v1266 = vadd.f32 0.0, %v1265
        %1267 = vdwg.mxu0
        %s1268 = sld [smem:[#allocation5]]
        %s1269 = ssub.f32 0.0, %s1268
        %v1270 = vstv %s1269
        %vm1271 = vcmp.gt.f32.partialorder %v1054, %v1270
        %vm1272 = vcmp.gt.f32.partialorder %v1056, %v1270
        %v1273 = vsel %vm1271, 1, 0
        %v1274 = vsel %vm1272, 1, 0
        %v1275 = vcvt.s32.f32 %v1273
        %v1276 = vcvt.s32.f32 %v1274
        %1277 = vadd.xlane.f32.xlu0 %v1275
        %v1278 = vpop.xlane.xlu0 %1277
        %1279 = vadd.xlane.f32.xlu0 %v1276
        %v1280 = vpop.xlane.xlu0 %1279
        %v1281 = vrcp.pop 128.0
        %v1282 = vmul.f32 128.0, %v1281
        %v1283 = vsub.f32 1.0, %v1282
        %v1284 = vmul.f32 %v1281, %v1283
        %v1285 = vadd.f32 %v1281, %v1284
        %vm1286 = vweird.f32 %v1281
        %v1287 = vsel %vm1286, %v1281, %v1285
        %v1288 = vmul.f32 %v1278, %v1287
        %v1289 = vmul.f32 %v1280, %v1287
        %1290 = vmax.xlane.f32.xlu0 %v1054
        %v1291 = vpop.xlane.xlu0 %1290
        %1292 = vmax.xlane.f32.xlu0 %v1056
        %v1293 = vpop.xlane.xlu0 %1292
        %v1294 = vstv %s1268
        %v1295 = vadd.f32 %v1291, %v1294
        %v1296 = vadd.f32 %v1293, %v1294
        %s1297 = sld [smem:[#allocation5 + $0x1]]
        %s1298 = ssub.f32 0.0, %s1297
        %v1299 = vstv %s1298
        %vm1300 = vcmp.gt.f32.partialorder %v1068, %v1299
        %vm1301 = vcmp.gt.f32.partialorder %v1070, %v1299
        %v1302 = vsel %vm1300, 1, 0
        %v1303 = vsel %vm1301, 1, 0
        %v1304 = vcvt.s32.f32 %v1302
        %v1305 = vcvt.s32.f32 %v1303
        %1306 = vadd.xlane.f32.xlu0 %v1304
        %v1307 = vpop.xlane.xlu0 %1306
        %1308 = vadd.xlane.f32.xlu0 %v1305
        %v1309 = vpop.xlane.xlu0 %1308
        %v1310 = vmul.f32 %v1307, %v1287
        %v1311 = vmul.f32 %v1309, %v1287
        %1312 = vmax.xlane.f32.xlu0 %v1068
        %v1313 = vpop.xlane.xlu0 %1312
        %1314 = vmax.xlane.f32.xlu0 %v1070
        %v1315 = vpop.xlane.xlu0 %1314
        %v1316 = vstv %s1297
        %v1317 = vadd.f32 %v1313, %v1316
        %v1318 = vadd.f32 %v1315, %v1316
        %s1319 = sld [smem:[#allocation5 + $0x2]]
        %s1320 = ssub.f32 0.0, %s1319
        %v1321 = vstv %s1320
        %vm1322 = vcmp.gt.f32.partialorder %v1082, %v1321
        %vm1323 = vcmp.gt.f32.partialorder %v1084, %v1321
        %v1324 = vsel %vm1322, 1, 0
        %v1325 = vsel %vm1323, 1, 0
        %v1326 = vcvt.s32.f32 %v1324
        %v1327 = vcvt.s32.f32 %v1325
        %1328 = vadd.xlane.f32.xlu0 %v1326
        %v1329 = vpop.xlane.xlu0 %1328
        %1330 = vadd.xlane.f32.xlu0 %v1327
        %v1331 = vpop.xlane.xlu0 %1330
        %v1332 = vmul.f32 %v1329, %v1287
        %v1333 = vmul.f32 %v1331, %v1287
        %1334 = vmax.xlane.f32.xlu0 %v1082
        %v1335 = vpop.xlane.xlu0 %1334
        %1336 = vmax.xlane.f32.xlu0 %v1084
        %v1337 = vpop.xlane.xlu0 %1336
        %v1338 = vstv %s1319
        %v1339 = vadd.f32 %v1335, %v1338
        %v1340 = vadd.f32 %v1337, %v1338
        %s1341 = sld [smem:[#allocation5 + $0x3]]
        %s1342 = ssub.f32 0.0, %s1341
        %v1343 = vstv %s1342
        %vm1344 = vcmp.gt.f32.partialorder %v1096, %v1343
        %vm1345 = vcmp.gt.f32.partialorder %v1098, %v1343
        %v1346 = vsel %vm1344, 1, 0
        %v1347 = vsel %vm1345, 1, 0
        %v1348 = vcvt.s32.f32 %v1346
        %v1349 = vcvt.s32.f32 %v1347
        %1350 = vadd.xlane.f32.xlu0 %v1348
        %v1351 = vpop.xlane.xlu0 %1350
        %1352 = vadd.xlane.f32.xlu0 %v1349
        %v1353 = vpop.xlane.xlu0 %1352
        %v1354 = vmul.f32 %v1351, %v1287
        %v1355 = vmul.f32 %v1353, %v1287
        %1356 = vmax.xlane.f32.xlu0 %v1096
        %v1357 = vpop.xlane.xlu0 %1356
        %1358 = vmax.xlane.f32.xlu0 %v1098
        %v1359 = vpop.xlane.xlu0 %1358
        %v1360 = vstv %s1341
        %v1361 = vadd.f32 %v1357, %v1360
        %v1362 = vadd.f32 %v1359, %v1360
        %s1363 = sld [smem:[#allocation5 + $0x4]]
        %s1364 = ssub.f32 0.0, %s1363
        %v1365 = vstv %s1364
        %vm1366 = vcmp.gt.f32.partialorder %v1110, %v1365
        %vm1367 = vcmp.gt.f32.partialorder %v1112, %v1365
        %v1368 = vsel %vm1366, 1, 0
        %v1369 = vsel %vm1367, 1, 0
        %v1370 = vcvt.s32.f32 %v1368
        %v1371 = vcvt.s32.f32 %v1369
        %1372 = vadd.xlane.f32.xlu0 %v1370
        %v1373 = vpop.xlane.xlu0 %1372
        %1374 = vadd.xlane.f32.xlu0 %v1371
        %v1375 = vpop.xlane.xlu0 %1374
        %v1376 = vmul.f32 %v1373, %v1287
        %v1377 = vmul.f32 %v1375, %v1287
        %1378 = vmax.xlane.f32.xlu0 %v1110
        %v1379 = vpop.xlane.xlu0 %1378
        %1380 = vmax.xlane.f32.xlu0 %v1112
        %v1381 = vpop.xlane.xlu0 %1380
        %v1382 = vstv %s1363
        %v1383 = vadd.f32 %v1379, %v1382
        %v1384 = vadd.f32 %v1381, %v1382
        %s1385 = sld [smem:[#allocation5 + $0x5]]
        %s1386 = ssub.f32 0.0, %s1385
        %v1387 = vstv %s1386
        %vm1388 = vcmp.gt.f32.partialorder %v1124, %v1387
        %vm1389 = vcmp.gt.f32.partialorder %v1126, %v1387
        %v1390 = vsel %vm1388, 1, 0
        %v1391 = vsel %vm1389, 1, 0
        %v1392 = vcvt.s32.f32 %v1390
        %v1393 = vcvt.s32.f32 %v1391
        %1394 = vadd.xlane.f32.xlu0 %v1392
        %v1395 = vpop.xlane.xlu0 %1394
        %1396 = vadd.xlane.f32.xlu0 %v1393
        %v1397 = vpop.xlane.xlu0 %1396
        %v1398 = vmul.f32 %v1395, %v1287
        %v1399 = vmul.f32 %v1397, %v1287
        %1400 = vmax.xlane.f32.xlu0 %v1124
        %v1401 = vpop.xlane.xlu0 %1400
        %1402 = vmax.xlane.f32.xlu0 %v1126
        %v1403 = vpop.xlane.xlu0 %1402
        %v1404 = vstv %s1385
        %v1405 = vadd.f32 %v1401, %v1404
        %v1406 = vadd.f32 %v1403, %v1404
        %s1407 = sld [smem:[#allocation5 + $0x6]]
        %s1408 = ssub.f32 0.0, %s1407
        %v1409 = vstv %s1408
        %vm1410 = vcmp.gt.f32.partialorder %v1138, %v1409
        %vm1411 = vcmp.gt.f32.partialorder %v1140, %v1409
        %v1412 = vsel %vm1410, 1, 0
        %v1413 = vsel %vm1411, 1, 0
        %v1414 = vcvt.s32.f32 %v1412
        %v1415 = vcvt.s32.f32 %v1413
        %1416 = vadd.xlane.f32.xlu0 %v1414
        %v1417 = vpop.xlane.xlu0 %1416
        %1418 = vadd.xlane.f32.xlu0 %v1415
        %v1419 = vpop.xlane.xlu0 %1418
        %v1420 = vmul.f32 %v1417, %v1287
        %v1421 = vmul.f32 %v1419, %v1287
        %1422 = vmax.xlane.f32.xlu0 %v1138
        %v1423 = vpop.xlane.xlu0 %1422
        %1424 = vmax.xlane.f32.xlu0 %v1140
        %v1425 = vpop.xlane.xlu0 %1424
        %v1426 = vstv %s1407
        %v1427 = vadd.f32 %v1423, %v1426
        %v1428 = vadd.f32 %v1425, %v1426
        %s1429 = sld [smem:[#allocation5 + $0x7]]
        %s1430 = ssub.f32 0.0, %s1429
        %v1431 = vstv %s1430
        %vm1432 = vcmp.gt.f32.partialorder %v1152, %v1431
        %vm1433 = vcmp.gt.f32.partialorder %v1154, %v1431
        %v1434 = vsel %vm1432, 1, 0
        %v1435 = vsel %vm1433, 1, 0
        %v1436 = vcvt.s32.f32 %v1434
        %v1437 = vcvt.s32.f32 %v1435
        %1438 = vadd.xlane.f32.xlu0 %v1436
        %v1439 = vpop.xlane.xlu0 %1438
        %1440 = vadd.xlane.f32.xlu0 %v1437
        %v1441 = vpop.xlane.xlu0 %1440
        %v1442 = vmul.f32 %v1439, %v1287
        %v1443 = vmul.f32 %v1441, %v1287
        %1444 = vmax.xlane.f32.xlu0 %v1152
        %v1445 = vpop.xlane.xlu0 %1444
        %1446 = vmax.xlane.f32.xlu0 %v1154
        %v1447 = vpop.xlane.xlu0 %1446
        %v1448 = vstv %s1429
        %v1449 = vadd.f32 %v1445, %v1448
        %v1450 = vadd.f32 %v1447, %v1448
        %s1451 = sld [smem:[#allocation5 + $0x8]]
        %s1452 = ssub.f32 0.0, %s1451
        %v1453 = vstv %s1452
        %vm1454 = vcmp.gt.f32.partialorder %v1166, %v1453
        %vm1455 = vcmp.gt.f32.partialorder %v1168, %v1453
        %v1456 = vsel %vm1454, 1, 0
        %v1457 = vsel %vm1455, 1, 0
        %v1458 = vcvt.s32.f32 %v1456
        %v1459 = vcvt.s32.f32 %v1457
        %1460 = vadd.xlane.f32.xlu0 %v1458
        %v1461 = vpop.xlane.xlu0 %1460
        %1462 = vadd.xlane.f32.xlu0 %v1459
        %v1463 = vpop.xlane.xlu0 %1462
        %v1464 = vmul.f32 %v1461, %v1287
        %v1465 = vmul.f32 %v1463, %v1287
        %1466 = vmax.xlane.f32.xlu0 %v1166
        %v1467 = vpop.xlane.xlu0 %1466
        %1468 = vmax.xlane.f32.xlu0 %v1168
        %v1469 = vpop.xlane.xlu0 %1468
        %v1470 = vstv %s1451
        %v1471 = vadd.f32 %v1467, %v1470
        %v1472 = vadd.f32 %v1469, %v1470
        %s1473 = sld [smem:[#allocation5 + $0x9]]
        %s1474 = ssub.f32 0.0, %s1473
        %v1475 = vstv %s1474
        %vm1476 = vcmp.gt.f32.partialorder %v1180, %v1475
        %vm1477 = vcmp.gt.f32.partialorder %v1182, %v1475
        %v1478 = vsel %vm1476, 1, 0
        %v1479 = vsel %vm1477, 1, 0
        %v1480 = vcvt.s32.f32 %v1478
        %v1481 = vcvt.s32.f32 %v1479
        %1482 = vadd.xlane.f32.xlu0 %v1480
        %v1483 = vpop.xlane.xlu0 %1482
        %1484 = vadd.xlane.f32.xlu0 %v1481
        %v1485 = vpop.xlane.xlu0 %1484
        %v1486 = vmul.f32 %v1483, %v1287
        %v1487 = vmul.f32 %v1485, %v1287
        %1488 = vmax.xlane.f32.xlu0 %v1180
        %v1489 = vpop.xlane.xlu0 %1488
        %1490 = vmax.xlane.f32.xlu0 %v1182
        %v1491 = vpop.xlane.xlu0 %1490
        %v1492 = vstv %s1473
        %v1493 = vadd.f32 %v1489, %v1492
        %v1494 = vadd.f32 %v1491, %v1492
        %s1495 = sld [smem:[#allocation5 + $0xa]]
        %s1496 = ssub.f32 0.0, %s1495
        %v1497 = vstv %s1496
        %vm1498 = vcmp.gt.f32.partialorder %v1194, %v1497
        %vm1499 = vcmp.gt.f32.partialorder %v1196, %v1497
        %v1500 = vsel %vm1498, 1, 0
        %v1501 = vsel %vm1499, 1, 0
        %v1502 = vcvt.s32.f32 %v1500
        %v1503 = vcvt.s32.f32 %v1501
        %1504 = vadd.xlane.f32.xlu0 %v1502
        %v1505 = vpop.xlane.xlu0 %1504
        %1506 = vadd.xlane.f32.xlu0 %v1503
        %v1507 = vpop.xlane.xlu0 %1506
        %v1508 = vmul.f32 %v1505, %v1287
        %v1509 = vmul.f32 %v1507, %v1287
        %1510 = vmax.xlane.f32.xlu0 %v1194
        %v1511 = vpop.xlane.xlu0 %1510
        %1512 = vmax.xlane.f32.xlu0 %v1196
        %v1513 = vpop.xlane.xlu0 %1512
        %v1514 = vstv %s1495
        %v1515 = vadd.f32 %v1511, %v1514
        %v1516 = vadd.f32 %v1513, %v1514
        %s1517 = sld [smem:[#allocation5 + $0xb]]
        %s1518 = ssub.f32 0.0, %s1517
        %v1519 = vstv %s1518
        %vm1520 = vcmp.gt.f32.partialorder %v1208, %v1519
        %vm1521 = vcmp.gt.f32.partialorder %v1210, %v1519
        %v1522 = vsel %vm1520, 1, 0
        %v1523 = vsel %vm1521, 1, 0
        %v1524 = vcvt.s32.f32 %v1522
        %v1525 = vcvt.s32.f32 %v1523
        %1526 = vadd.xlane.f32.xlu0 %v1524
        %v1527 = vpop.xlane.xlu0 %1526
        %1528 = vadd.xlane.f32.xlu0 %v1525
        %v1529 = vpop.xlane.xlu0 %1528
        %v1530 = vmul.f32 %v1527, %v1287
        %v1531 = vmul.f32 %v1529, %v1287
        %1532 = vmax.xlane.f32.xlu0 %v1208
        %v1533 = vpop.xlane.xlu0 %1532
        %1534 = vmax.xlane.f32.xlu0 %v1210
        %v1535 = vpop.xlane.xlu0 %1534
        %v1536 = vstv %s1517
        %v1537 = vadd.f32 %v1533, %v1536
        %v1538 = vadd.f32 %v1535, %v1536
        %s1539 = sld [smem:[#allocation5 + $0xc]]
        %s1540 = ssub.f32 0.0, %s1539
        %v1541 = vstv %s1540
        %vm1542 = vcmp.gt.f32.partialorder %v1222, %v1541
        %vm1543 = vcmp.gt.f32.partialorder %v1224, %v1541
        %v1544 = vsel %vm1542, 1, 0
        %v1545 = vsel %vm1543, 1, 0
        %v1546 = vcvt.s32.f32 %v1544
        %v1547 = vcvt.s32.f32 %v1545
        %1548 = vadd.xlane.f32.xlu0 %v1546
        %v1549 = vpop.xlane.xlu0 %1548
        %1550 = vadd.xlane.f32.xlu0 %v1547
        %v1551 = vpop.xlane.xlu0 %1550
        %v1552 = vmul.f32 %v1549, %v1287
        %v1553 = vmul.f32 %v1551, %v1287
        %1554 = vmax.xlane.f32.xlu0 %v1222
        %v1555 = vpop.xlane.xlu0 %1554
        %1556 = vmax.xlane.f32.xlu0 %v1224
        %v1557 = vpop.xlane.xlu0 %1556
        %v1558 = vstv %s1539
        %v1559 = vadd.f32 %v1555, %v1558
        %v1560 = vadd.f32 %v1557, %v1558
        %s1561 = sld [smem:[#allocation5 + $0xd]]
        %s1562 = ssub.f32 0.0, %s1561
        %v1563 = vstv %s1562
        %vm1564 = vcmp.gt.f32.partialorder %v1236, %v1563
        %vm1565 = vcmp.gt.f32.partialorder %v1238, %v1563
        %v1566 = vsel %vm1564, 1, 0
        %v1567 = vsel %vm1565, 1, 0
        %v1568 = vcvt.s32.f32 %v1566
        %v1569 = vcvt.s32.f32 %v1567
        %1570 = vadd.xlane.f32.xlu0 %v1568
        %v1571 = vpop.xlane.xlu0 %1570
        %1572 = vadd.xlane.f32.xlu0 %v1569
        %v1573 = vpop.xlane.xlu0 %1572
        %v1574 = vmul.f32 %v1571, %v1287
        %v1575 = vmul.f32 %v1573, %v1287
        %1576 = vmax.xlane.f32.xlu0 %v1236
        %v1577 = vpop.xlane.xlu0 %1576
        %1578 = vmax.xlane.f32.xlu0 %v1238
        %v1579 = vpop.xlane.xlu0 %1578
        %v1580 = vstv %s1561
        %v1581 = vadd.f32 %v1577, %v1580
        %v1582 = vadd.f32 %v1579, %v1580
        %s1583 = sld [smem:[#allocation5 + $0xe]]
        %s1584 = ssub.f32 0.0, %s1583
        %v1585 = vstv %s1584
        %vm1586 = vcmp.gt.f32.partialorder %v1250, %v1585
        %vm1587 = vcmp.gt.f32.partialorder %v1252, %v1585
        %v1588 = vsel %vm1586, 1, 0
        %v1589 = vsel %vm1587, 1, 0
        %v1590 = vcvt.s32.f32 %v1588
        %v1591 = vcvt.s32.f32 %v1589
        %1592 = vadd.xlane.f32.xlu0 %v1590
        %v1593 = vpop.xlane.xlu0 %1592
        %1594 = vadd.xlane.f32.xlu0 %v1591
        %v1595 = vpop.xlane.xlu0 %1594
        %v1596 = vmul.f32 %v1593, %v1287
        %v1597 = vmul.f32 %v1595, %v1287
        %1598 = vmax.xlane.f32.xlu0 %v1250
        %v1599 = vpop.xlane.xlu0 %1598
        %1600 = vmax.xlane.f32.xlu0 %v1252
        %v1601 = vpop.xlane.xlu0 %1600
        %v1602 = vstv %s1583
        %v1603 = vadd.f32 %v1599, %v1602
        %v1604 = vadd.f32 %v1601, %v1602
        %s1605 = sld [smem:[#allocation5 + $0xf]]
        %s1606 = ssub.f32 0.0, %s1605
        %v1607 = vstv %s1606
        %vm1608 = vcmp.gt.f32.partialorder %v1264, %v1607
        %vm1609 = vcmp.gt.f32.partialorder %v1266, %v1607
        %v1610 = vsel %vm1608, 1, 0
        %v1611 = vsel %vm1609, 1, 0
        %v1612 = vcvt.s32.f32 %v1610
        %v1613 = vcvt.s32.f32 %v1611
        %1614 = vadd.xlane.f32.xlu0 %v1612
        %v1615 = vpop.xlane.xlu0 %1614
        %1616 = vadd.xlane.f32.xlu0 %v1613
        %v1617 = vpop.xlane.xlu0 %1616
        %v1618 = vmul.f32 %v1615, %v1287
        %v1619 = vmul.f32 %v1617, %v1287
        %1620 = vmax.xlane.f32.xlu0 %v1264
        %v1621 = vpop.xlane.xlu0 %1620
        %1622 = vmax.xlane.f32.xlu0 %v1266
        %v1623 = vpop.xlane.xlu0 %1622
        %v1624 = vstv %s1605
        %v1625 = vadd.f32 %v1621, %v1624
        %v1626 = vadd.f32 %v1623, %v1624
        %vm1627 = vcmask 7168
        %v1628 = vsel %vm1627, %v1288, %v1310
        %v1629 = vsel %vm1627, %v1289, %v1311
        %vm1630 = vcmask 15360
        %v1631 = vsel %vm1630, %v1628, %v1332
        %v1632 = vsel %vm1630, %v1629, %v1333
        %vm1633 = vcmask 23552
        %v1634 = vsel %vm1633, %v1631, %v1354
        %v1635 = vsel %vm1633, %v1632, %v1355
        %vm1636 = vcmask 31744
        %v1637 = vsel %vm1636, %v1634, %v1376
        %v1638 = vsel %vm1636, %v1635, %v1377
        %vm1639 = vcmask 39936
        %v1640 = vsel %vm1639, %v1637, %v1398
        %v1641 = vsel %vm1639, %v1638, %v1399
        %vm1642 = vcmask 48128
        %v1643 = vsel %vm1642, %v1640, %v1420
        %v1644 = vsel %vm1642, %v1641, %v1421
        %vm1645 = vcmask 56320
        %v1646 = vsel %vm1645, %v1643, %v1442
        %v1647 = vsel %vm1645, %v1644, %v1443
        %vm1648 = vcmask 64512
        %v1649 = vsel %vm1648, %v1646, %v1464
        %v1650 = vsel %vm1648, %v1647, %v1465
        %vm1651 = vcmask 72704
        %v1652 = vsel %vm1651, %v1649, %v1486
        %v1653 = vsel %vm1651, %v1650, %v1487
        %vm1654 = vcmask 80896
        %v1655 = vsel %vm1654, %v1652, %v1508
        %v1656 = vsel %vm1654, %v1653, %v1509
        %vm1657 = vcmask 89088
        %v1658 = vsel %vm1657, %v1655, %v1530
        %v1659 = vsel %vm1657, %v1656, %v1531
        %vm1660 = vcmask 97280
        %v1661 = vsel %vm1660, %v1658, %v1552
        %v1662 = vsel %vm1660, %v1659, %v1553
        %vm1663 = vcmask 105472
        %v1664 = vsel %vm1663, %v1661, %v1574
        %v1665 = vsel %vm1663, %v1662, %v1575
        %vm1666 = vcmask 113664
        %v1667 = vsel %vm1666, %v1664, %v1596
        %v1668 = vsel %vm1666, %v1665, %v1597
        %vm1669 = vcmask 121856
        %v1670 = vsel %vm1669, %v1667, %v1618
        %v1671 = vsel %vm1669, %v1668, %v1619
        %v1672 = vsel %vm1627, %v1295, %v1317
        %v1673 = vsel %vm1627, %v1296, %v1318
        %v1674 = vsel %vm1630, %v1672, %v1339
        %v1675 = vsel %vm1630, %v1673, %v1340
        %v1676 = vsel %vm1633, %v1674, %v1361
        %v1677 = vsel %vm1633, %v1675, %v1362
        %v1678 = vsel %vm1636, %v1676, %v1383
        %v1679 = vsel %vm1636, %v1677, %v1384
        %v1680 = vsel %vm1639, %v1678, %v1405
        %v1681 = vsel %vm1639, %v1679, %v1406
        %v1682 = vsel %vm1642, %v1680, %v1427
        %v1683 = vsel %vm1642, %v1681, %v1428
        %v1684 = vsel %vm1645, %v1682, %v1449
        %v1685 = vsel %vm1645, %v1683, %v1450
        %v1686 = vsel %vm1648, %v1684, %v1471
        %v1687 = vsel %vm1648, %v1685, %v1472
        %v1688 = vsel %vm1651, %v1686, %v1493
        %v1689 = vsel %vm1651, %v1687, %v1494
        %v1690 = vsel %vm1654, %v1688, %v1515
        %v1691 = vsel %vm1654, %v1689, %v1516
        %v1692 = vsel %vm1657, %v1690, %v1537
        %v1693 = vsel %vm1657, %v1691, %v1538
        %v1694 = vsel %vm1660, %v1692, %v1559
        %v1695 = vsel %vm1660, %v1693, %v1560
        %v1696 = vsel %vm1663, %v1694, %v1581
        %v1697 = vsel %vm1663, %v1695, %v1582
        %v1698 = vsel %vm1666, %v1696, %v1603
        %v1699 = vsel %vm1666, %v1697, %v1604
        %v1700 = vsel %vm1669, %v1698, %v1625
        %v1701 = vsel %vm1669, %v1699, %v1626
        %1704 = vrot.lane.b32.xlu0 %v1700, 16
        %v1705 = vpop.permute.xlu0 %1704
        %1706 = vrot.lane.b32.xlu0 %v1701, 16
        %v1707 = vpop.permute.xlu0 %1706
        %vm1710 = vcmask 130048
        %v1711 = vsel %vm1710, %v1670, %v1705
        %v1712 = vsel %vm1710, %v1671, %v1707
        %v1713 = vld [vmem:[#allocation6] sm:$0xff]
        %v1714 = vld [vmem:[#allocation6 + $0x8] sm:$0xff]
        %v1715 = vld [vmem:[#allocation6 + $0x10] sm:$0xff]
        %vm1716 = vcmask 261120
        %v1718 = vsel %vm1716, %v1713, 0
        %v1721 = vsel %vm1716, %v1714, 0
        %v1724 = vsel %vm1716, %v1715, 0
        %v1727 = vsel %vm1716, %v1711, 0
        %v1730 = vsel %vm1716, %v1712, 0
        %1732 = vmatpush.xpose.msra.mxu0 0.0
        %1733 = vmatpush.xpose.msra.mxu0 0.0
        %1734 = vmatpush.xpose.msra.mxu0 0.0
        %1735 = vmatpush.xpose.msra.mxu0 0.0
        %1736 = vmatpush.xpose.msra.mxu0 0.0
        %1737 = vmatpush.xpose.msra.mxu0 0.0
        %1738 = vmatpush.xpose.msra.mxu0 0.0
        %1739 = vmatpush.xpose.msra.mxu0 0.0
        %1740 = vmatpush.xpose.msra.mxu0 0.0
        %1741 = vmatpush.xpose.msra.mxu0 0.0
        %1742 = vmatpush.xpose.msra.mxu0 0.0
        %1743 = vmatpush.xpose.msra.mxu0 0.0
        %1744 = vmatpush.xpose.msra.mxu0 0.0
        %1745 = vmatpush.xpose.msra.mxu0 0.0
        %1746 = vmatpush.xpose.msra.mxu0 %v1730
        %1747 = vmatpush.xpose.msra.mxu0 %v1727
        %1748 = vmatmul.f32.gmra.mxu0 %v1718
        %v1749 = vpop.f32.mrf.mxu0
        %v1750 = vadd.f32 0.0, %v1749
        %1751 = vmatmul.f32.gmra.mxu0 %v1721
        %v1752 = vpop.f32.mrf.mxu0
        %v1753 = vadd.f32 0.0, %v1752
        %1754 = vmatmul.f32.gmra.mxu0 %v1724
        %v1755 = vpop.f32.mrf.mxu0
        %v1756 = vadd.f32 0.0, %v1755
        %1757 = vdwg.mxu0
        %v1758 = vld [vmem:[%s4] sm:$0xff]
        %v1759 = vld [vmem:[%s4 + $0x8] sm:$0xff]
        %v1760 = vld [vmem:[%s4 + $0x10] sm:$0xff]
        %vm1761 = vcmp.gt.f32.partialorder %v1758, 0.0
        %vm1762 = vcmp.gt.f32.partialorder %v1759, 0.0
        %vm1763 = vcmp.gt.f32.partialorder %v1760, 0.0
        %v1764 = vsel %vm1761, %v1750, -1e+30
        %v1765 = vsel %vm1762, %v1753, -1e+30
        %v1766 = vsel %vm1763, %v1756, -1e+30
        %v1767 = vsel %vm1710, %v1764, -inf
        %1768 = vmax.xlane.f32.xlu0 %v1767
        %v1769 = vpop.xlane.xlu0 %1768
        %v1770 = vsel %vm1710, %v1765, -inf
        %1771 = vmax.xlane.f32.xlu0 %v1770
        %v1772 = vpop.xlane.xlu0 %1771
        %v1773 = vsel %vm1710, %v1766, -inf
        %1774 = vmax.xlane.f32.xlu0 %v1773
        %v1775 = vpop.xlane.xlu0 %1774
        %v1776 = vsub.f32 %v1764, %v1769
        %v1777 = vsub.f32 %v1765, %v1772
        %v1778 = vsub.f32 %v1766, %v1775
        %v1779 = vmul.f32 %v1776, 1.442695
        %v1780 = vpow.pop %v1779
        %v1781 = vmul.f32 %v1777, 1.442695
        %v1782 = vpow.pop %v1781
        %v1783 = vmul.f32 %v1778, 1.442695
        %v1784 = vpow.pop %v1783
        %v1785 = vmul.f32 %v1780, %v1758
        %v1786 = vmul.f32 %v1782, %v1759
        %v1787 = vmul.f32 %v1784, %v1760
        %v1788 = vsel %vm1710, %v1785, 0.0
        %1789 = vadd.xlane.f32.xlu0 %v1788
        %v1790 = vpop.xlane.xlu0 %1789
        %v1791 = vsel %vm1710, %v1786, 0.0
        %1792 = vadd.xlane.f32.xlu0 %v1791
        %v1793 = vpop.xlane.xlu0 %1792
        %v1794 = vsel %vm1710, %v1787, 0.0
        %1795 = vadd.xlane.f32.xlu0 %v1794
        %v1796 = vpop.xlane.xlu0 %1795
        %v1797 = vmax.f32 %v1790, 1e-20
        %v1798 = vmax.f32 %v1793, 1e-20
        %v1799 = vmax.f32 %v1796, 1e-20
        %v1800 = vrcp.pop %v1797
        %v1801 = vrcp.pop %v1798
        %v1802 = vrcp.pop %v1799
        %v1803 = vmul.f32 %v1785, %v1800
        %v1804 = vmul.f32 %v1786, %v1801
        %v1805 = vmul.f32 %v1787, %v1802
        %v1807 = vsel %vm1710, %v1803, 0
        %v1810 = vsel %vm1710, %v1804, 0
        %v1813 = vsel %vm1710, %v1805, 0
        %1815 = vmatpush.msra.mxu0 0.0
        %1816 = vmatpush.msra.mxu0 0.0
        %1817 = vmatpush.msra.mxu0 0.0
        %1818 = vmatpush.msra.mxu0 0.0
        %1819 = vmatpush.msra.mxu0 0.0
        %1820 = vmatpush.msra.mxu0 0.0
        %1821 = vmatpush.msra.mxu0 0.0
        %1822 = vmatpush.msra.mxu0 0.0
        %1823 = vmatpush.msra.mxu0 0.0
        %1824 = vmatpush.msra.mxu0 0.0
        %1825 = vmatpush.msra.mxu0 0.0
        %1826 = vmatpush.msra.mxu0 0.0
        %1827 = vmatpush.msra.mxu0 0.0
        %1828 = vmatpush.msra.mxu0 0.0
        %1829 = vmatpush.msra.mxu0 %v274
        %1830 = vmatpush.msra.mxu0 %v273
        %1831 = vmatmul.f32.gmra.mxu0 %v1807
        %v1832 = vpop.f32.mrf.mxu0
        %v1833 = vadd.f32 0.0, %v1832
        %1834 = vmatmul.f32.gmra.mxu0 %v1810
        %v1835 = vpop.f32.mrf.mxu0
        %v1836 = vadd.f32 0.0, %v1835
        %1837 = vmatmul.f32.gmra.mxu0 %v1813
        %v1838 = vpop.f32.mrf.mxu0
        %v1839 = vadd.f32 0.0, %v1838
        %1840 = vdwg.mxu0
        %1841 = vst [vmem:[%s272] sm:$0xff] %v1833
        %1842 = vst [vmem:[%s272 + $0x8] sm:$0xff] %v1836
        %1843 = vst [vmem:[%s272 + $0x10] sm:$0xff] %v1839
        %p1844 = scmp.lt.s32.totalorder %s19, 1
        %s1845 = scalar_select %p1844, %s19, 1
        %s1846 = smul.addr %s1845, 3
        %s1847 = smul.addr %s1846, 8
        %s1848 = scalar_lea.vmem %s5, %s1847
        // Predicated region
        $region53: #{region_based_pooling_forward.1} parent=39 // pred_check
          %p1849 = pneg %p147
        $region54: #{region_based_pooling_forward.1} parent=39 // pred_check_branch
          %1851 = sbr.rel (%p1849) target = $region56
        $region55: #{region_based_pooling_forward.1} parent=39 // pred_region
          _
        $region56: #{region_based_pooling_forward.1} parent=39 // pred_fallthru
          _
      $region40: #{region_based_pooling_forward.1} parent=5 // pred_fallthru
        _
      %p1852 = scmp.le.s32.totalorder 2, %s14
      // Predicated region
      $region57: #{region_based_pooling_forward.1} parent=5 // pred_check
        %p1853 = pneg %p1852
      $region58: #{region_based_pooling_forward.1} parent=5 // pred_check_branch
        %1855 = sbr.rel (%p1853) target = $region60
      $region59: #{region_based_pooling_forward.1} parent=5 // pred_region
        %s1856 = ssub.s32 %s14, 2
        // Predicated region
        $region61: #{region_based_pooling_forward.1} parent=59 // pred_check
          %p1857 = pneg %p153
        $region62: #{region_based_pooling_forward.1} parent=59 // pred_check_branch
          %1859 = sbr.rel (%p1857) target = $region64
        $region63: #{region_based_pooling_forward.1} parent=59 // pred_region
          %p1860 = scmp.lt.s32.totalorder %s20, 1
          %s1861 = scalar_select %p1860, %s20, 1
          %s1862 = smul.addr %s1861, 3
          %s1863 = smul.addr %s1862, 8
          %s1864 = scalar_lea.vmem %s5, %s1863
        $region64: #{region_based_pooling_forward.1} parent=59 // pred_fallthru
          _
      $region60: #{region_based_pooling_forward.1} parent=5 // pred_fallthru
        _
    $region6: #{region_based_pooling_forward.1} parent=1 // loop_footer
      %s18 = sadd.s32 1, %s14
    $region7: #{region_based_pooling_forward.1} parent=1 // loop_footer_branch
      %13 = sbr.rel target = $region3
    $region8: #{region_based_pooling_forward.1} parent=1 // loop_exit
      _
    %1865 = vsyncpa [#allocation3], 1
    %s1866 = scalar_lea.sflag [#allocation3], 1
    %1867 = vsyncpa %s1866, 1
    %1868 = vsyncpa [#allocation7], 1
    %1869 = vsyncpa [#allocation4], 1
    %s1870 = scalar_lea.sflag [#allocation4], 1
    %1871 = vsyncpa %s1870, 1

</llo_original>
